<compile_context>
chip_gen: v7x
topology: tpu7x:2x2x1
jax: 0.10.0
libtpu: 0.0.40
codegen_flags: <defaults>
</compile_context>

<pallas_src>
import math

import jax
import jax.numpy as jnp
from jax import lax
from jax.experimental import pallas as pl
from jax.experimental.pallas import tpu as pltpu

# ---------------- configuration (small synthetic sizes) ----------------
BATCH_SIZE = 2            # opt.batch_size / opt.number_gpu
FRAMES_SEQUENCE = 8
FRAMES4ATTENTION = 8      # == frames_sequence for the 2D branch here
FRAME_SIZE = 16
FEATURE_SIZE = 32         # CNN feature size (resnet50 stand-in output)
FEATURE_SIZE_DS = 16      # opt.feature_size_ds
N_CLASSES = 4             # opt.n_classes
CONV_HIDDEN = 8           # hidden channels of the stand-in feature extractor
SPLIT_INPUT = 2           # split+cat over batch == identity (handled in glue)

N_ITEMS = BATCH_SIZE * FRAMES_SEQUENCE      # 16 frames through the 2D CNN
HW = FRAME_SIZE * FRAME_SIZE                # 256 pixels per frame
PATCH_K = 9 * 3                             # 27 = 3x3 taps x RGB

# ---- packed parameter-slab layout: one f32 (SLAB_ROWS, 128) slab == one DMA
_R_CONVW = 0      # rows 0:8   cols 0:27    conv weight transposed (Ch, 27)
#                   rows 0:8   col  27      conv bias              (Ch, 1)
_R_WCOMB = 8      # rows 8:16  cols 0:48    folded proj@dim_ds@[Wq|Wk|Wv] / HW
_R_BCOMB = 16     # row  16    cols 0:48    folded qkv bias
_R_HBIAS = 17     # row  17    cols 0:4     folded head bias (b3*sum(W4)+b4)
_R_SEL = 18       # rows 18:20 cols 0:16    per-sample row-sum selector (B, N)
_R_MASK = 24      # rows 24:40 cols 0:16    block-diagonal softmax mask (N, N)
#                   rows 24:40 col  16      fc4 weight (Fds, 1)
#                   rows 24:40 cols 32:36   fc3 weight tiled over batch (N, C)
SLAB_ROWS = 40


# ------------------------- parameter initialization -------------------------
def _xavier(key, shape):
    fan_in, fan_out = shape[0], shape[1]
    bound = math.sqrt(6.0 / (fan_in + fan_out))
    return jax.random.uniform(key, shape, jnp.float32, -bound, bound)


def init_params(key):
    ks = jax.random.split(key, 8)
    return {
        # stand-in feature extractor (3x3 conv -> ReLU -> GAP -> linear)
        "conv_w": _xavier(ks[0], (PATCH_K, CONV_HIDDEN)),          # (kh,kw,cin) rows
        "conv_b": jnp.zeros((1, CONV_HIDDEN), jnp.float32),
        "proj_w": _xavier(ks[1], (CONV_HIDDEN, FEATURE_SIZE)),
        "proj_b": jnp.zeros((1, FEATURE_SIZE), jnp.float32),
        # BNet.dim_ds : Linear(feature_size, feature_size_ds), xavier_uniform
        "dimds_w": _xavier(ks[2], (FEATURE_SIZE, FEATURE_SIZE_DS)),
        "dimds_b": jnp.zeros((1, FEATURE_SIZE_DS), jnp.float32),
        # PayAttention stand-in (single-head self-attention projections)
        "wq": _xavier(ks[3], (FEATURE_SIZE_DS, FEATURE_SIZE_DS)),
        "wk": _xavier(ks[4], (FEATURE_SIZE_DS, FEATURE_SIZE_DS)),
        "wv": _xavier(ks[5], (FEATURE_SIZE_DS, FEATURE_SIZE_DS)),
        # BNet.fc3 : Linear(frames4attention, n_classes), xavier_uniform
        "fc3_w": _xavier(ks[6], (FRAMES4ATTENTION, N_CLASSES)),
        "fc3_b": jnp.zeros((1, N_CLASSES), jnp.float32),
        # BNet.fc4 : Linear(feature_size_ds, 1), xavier_uniform
        "fc4_w": _xavier(ks[7], (FEATURE_SIZE_DS, 1)),
        "fc4_b": jnp.zeros((1, 1), jnp.float32),
    }


# --------------------- single fused forward kernel (1 grid point) -----------
def make_fused_kernel(scale):
    qkv_width = 3 * FEATURE_SIZE_DS

    def kernel(patches_ref, slab_ref, o_ref):
        f32 = jnp.float32
        bf16 = jnp.bfloat16

        # ---- unpack the packed parameter slab (static slices, single DMA) ---
        convw_t = slab_ref[_R_CONVW:_R_CONVW + CONV_HIDDEN, 0:PATCH_K]          # (8,27)
        convb_t = slab_ref[_R_CONVW:_R_CONVW + CONV_HIDDEN, PATCH_K:PATCH_K + 1]  # (8,1)
        wcomb = slab_ref[_R_WCOMB:_R_WCOMB + CONV_HIDDEN, 0:qkv_width]          # (8,48)
        bcomb = slab_ref[_R_BCOMB:_R_BCOMB + 1, 0:qkv_width]                    # (1,48)
        hbias = slab_ref[_R_HBIAS:_R_HBIAS + 1, 0:N_CLASSES]                    # (1,4)
        sel = slab_ref[_R_SEL:_R_SEL + BATCH_SIZE, 0:N_ITEMS]                   # (2,16)
        mask = slab_ref[_R_MASK:_R_MASK + N_ITEMS, 0:N_ITEMS]                   # (16,16)
        fc4w = slab_ref[_R_MASK:_R_MASK + N_ITEMS, N_ITEMS:N_ITEMS + 1]         # (16,1)
        fc3t = slab_ref[_R_MASK:_R_MASK + N_ITEMS, 32:32 + N_CLASSES]           # (16,4)

        # ---- stand-in CNN: 3x3 conv as ONE lane-dense (8,27)x(27,4096) matmul
        # TODO(synk): resnet50/resnet3d/MFNET_3D are external modules not given;
        # deterministic stand-in = conv3x3 + ReLU + global-average-pool + linear.
        conv = jnp.dot(convw_t.astype(bf16), patches_ref[...],
                       preferred_element_type=f32)              # (Ch, N*HW) f32, dense lanes
        conv = jnp.maximum(conv + convb_t, 0.0)                  # bias + ReLU (VPU, f32)

        # ---- global average pool: per-frame lane-group reduction (XLU) ------
        # Columns of `conv` are N_ITEMS contiguous blocks of HW lanes; each block
        # is reduced and scattered to its lane of gsum via a one-hot select
        # (only elementwise + reduce ops -> guaranteed lowering, no reshapes).
        lane_idx = lax.broadcasted_iota(jnp.int32, (1, N_ITEMS), 1)
        gsum = jnp.zeros((CONV_HIDDEN, N_ITEMS), f32)
        for i in range(N_ITEMS):
            colsum = jnp.sum(conv[:, i * HW:(i + 1) * HW], axis=-1, keepdims=True)  # (8,1)
            gsum = gsum + jnp.where(lane_idx == i, colsum, 0.0)   # place in lane i
        # gsum is the per-frame SUM; the 1/HW mean scale is folded into wcomb.

        # ---- folded proj -> dim_ds -> {Wq,Wk,Wv}: ONE (16,8)x(8,48) matmul ---
        # Contract dim 0 of both operands (TN form) so gsum never needs an
        # explicit materialized transpose.
        qkv = lax.dot_general(gsum.astype(bf16), wcomb.astype(bf16),
                              (((0,), (0,)), ((), ())),
                              preferred_element_type=f32) + bcomb              # (N, 48)
        q = qkv[:, 0:FEATURE_SIZE_DS]
        k = qkv[:, FEATURE_SIZE_DS:2 * FEATURE_SIZE_DS]
        v = qkv[:, 2 * FEATURE_SIZE_DS:3 * FEATURE_SIZE_DS]

        # ---- PayAttention stand-in (single-head SDPA, block-diagonal mask) ---
        # TODO(synk): PayAttention is an external module; stand-in is single-head
        # scaled-dot-product self-attention over the frames4attention frames,
        # computed flat on (B*A, Fds) with a block-diagonal mask (== per-sample).
        s = lax.dot_general(q.astype(bf16), k.astype(bf16),
                            (((1,), (1,)), ((), ())),
                            preferred_element_type=f32) * scale                 # (N, N)
        s = s + mask
        s = s - jnp.max(s, axis=-1, keepdims=True)
        p = jnp.exp(s)                                                           # EUP
        p = p * pl.reciprocal(jnp.sum(p, axis=-1, keepdims=True), approx=True)
        att = jnp.dot(p.astype(bf16), v.astype(bf16),
                      preferred_element_type=f32)                                # (N, Fds)

        # ---- fc3 / fc4 with the transpose chain folded algebraically --------
        # y4[b,c] = sum_a W3[a,c]*(sum_f att[b,a,f]*W4[f]) + b3[c]*sum(W4) + b4
        # (kept f32: each matmul is well below one MXU push)
        t = jnp.dot(att, fc4w, preferred_element_type=f32)                       # (N, 1)
        out = jnp.dot(sel, fc3t * t, preferred_element_type=f32) + hbias         # (B, C)
        o_ref[...] = out

    return kernel


# ------------------------------- wrapper glue --------------------------------
def _im2col(x_nhwc):
    # glue: extract 3x3 padded patches; (N, H, W, C) -> (N, H*W, 9*C)
    n, h, w, c = x_nhwc.shape
    xp = jnp.pad(x_nhwc, ((0, 0), (1, 1), (1, 1), (0, 0)))
    cols = []
    for kh in range(3):
        for kw in range(3):
            cols.append(xp[:, kh:kh + h, kw:kw + w, :])
    patches = jnp.stack(cols, axis=-2)                                  # (N, H, W, 9, C)
    return patches.reshape(n, h * w, 9 * c)


def _build_param_slab(params):
    """Fold + pack every small parameter / constant into one (40,128) f32 slab."""
    # proj -> dim_ds -> {Wq,Wk,Wv} folded into a single (Ch, 3*Fds) weight.
    w1 = params["proj_w"] @ params["dimds_w"]                                   # (Ch, Fds)
    b1 = params["proj_b"] @ params["dimds_w"] + params["dimds_b"]               # (1, Fds)
    wqkv = jnp.concatenate([params["wq"], params["wk"], params["wv"]], axis=1)  # (Fds, 3Fds)
    w_comb = (w1 @ wqkv) / HW          # 1/HW (GAP mean) folded in; exact (HW = 2^8)
    b_comb = b1 @ wqkv                                                          # (1, 3Fds)
    # fc3/fc4 transpose-chain fold.
    fc3_tiled = jnp.tile(params["fc3_w"], (BATCH_SIZE, 1))                      # (N, C)
    head_bias = params["fc3_b"] * jnp.sum(params["fc4_w"]) + params["fc4_b"]    # (1, C)
    # attention constants.
    ids = jnp.arange(N_ITEMS) // FRAMES4ATTENTION
    mask = jnp.where(ids[:, None] == ids[None, :], 0.0, -1e30).astype(jnp.float32)
    sel = jnp.repeat(jnp.eye(BATCH_SIZE, dtype=jnp.float32), FRAMES4ATTENTION, axis=1)

    slab = jnp.zeros((SLAB_ROWS, 128), jnp.float32)
    slab = slab.at[_R_CONVW:_R_CONVW + CONV_HIDDEN, 0:PATCH_K].set(params["conv_w"].T)
    slab = slab.at[_R_CONVW:_R_CONVW + CONV_HIDDEN, PATCH_K:PATCH_K + 1].set(params["conv_b"].T)
    slab = slab.at[_R_WCOMB:_R_WCOMB + CONV_HIDDEN, 0:3 * FEATURE_SIZE_DS].set(w_comb)
    slab = slab.at[_R_BCOMB, 0:3 * FEATURE_SIZE_DS].set(b_comb[0])
    slab = slab.at[_R_HBIAS, 0:N_CLASSES].set(head_bias[0])
    slab = slab.at[_R_SEL:_R_SEL + BATCH_SIZE, 0:N_ITEMS].set(sel)
    slab = slab.at[_R_MASK:_R_MASK + N_ITEMS, 0:N_ITEMS].set(mask)
    slab = slab.at[_R_MASK:_R_MASK + N_ITEMS, N_ITEMS:N_ITEMS + 1].set(params["fc4_w"])
    slab = slab.at[_R_MASK:_R_MASK + N_ITEMS, 32:32 + N_CLASSES].set(fc3_tiled)
    return slab


def bnet_forward(x, params):
    # x: (batch_size, frames_sequence, 3, frame_size, frame_size)  (NCHW frames)
    # torch.split into split_input chunks + per-chunk CNN + torch.cat == whole batch.
    item = x.reshape(N_ITEMS, 3, FRAME_SIZE, FRAME_SIZE)
    x_nhwc = jnp.transpose(item, (0, 2, 3, 1))
    # Lane-dense (27, N*HW) bf16 patch slab: dense DMA + dense conv result lanes.
    # TODO(synk): at realistic frame sizes fuse im2col into the kernel as 9 shifted
    # accumulate-matmuls to avoid the 9x HBM expansion (negligible at 16x16 frames).
    patches_t = jnp.transpose(
        _im2col(x_nhwc).reshape(N_ITEMS * HW, PATCH_K)).astype(jnp.bfloat16)    # (27, 4096)

    slab = _build_param_slab(params)

    flops = (2 * PATCH_K * N_ITEMS * HW * CONV_HIDDEN          # conv matmul
             + 2 * N_ITEMS * CONV_HIDDEN * 3 * FEATURE_SIZE_DS  # folded qkv matmul
             + 4 * N_ITEMS * N_ITEMS * FEATURE_SIZE_DS)         # q.k^T + p.v
    bytes_accessed = patches_t.size * 2 + slab.size * 4 + BATCH_SIZE * N_CLASSES * 4

    # TODO(synk): single grid point == one TensorCore; when the stand-in extractor
    # is replaced by a real resnet50 / larger frames, add a leading "parallel"
    # grid axis over frames so v7x's second TensorCore is used.
    out2d = pl.pallas_call(
        make_fused_kernel(1.0 / math.sqrt(FEATURE_SIZE_DS)),
        out_shape=jax.ShapeDtypeStruct((BATCH_SIZE, N_CLASSES), jnp.float32),
        in_specs=[pl.BlockSpec(memory_space=pltpu.MemorySpace.VMEM),
                  pl.BlockSpec(memory_space=pltpu.MemorySpace.VMEM)],
        out_specs=pl.BlockSpec(memory_space=pltpu.MemorySpace.VMEM),
        cost_estimate=pl.CostEstimate(flops=flops,
                                      transcendentals=N_ITEMS * N_ITEMS,
                                      bytes_accessed=bytes_accessed),
    )(patches_t, slab)

    return out2d[:, :, None]                                          # (B, n_classes, 1)


# --------------------- unfused pure-JAX reference (checking) -----------------
def bnet_reference(x, params):
    """Original (unfused, transpose-based) structure; f32 except the bf16 conv."""
    x_nhwc = jnp.transpose(x.reshape(N_ITEMS, 3, FRAME_SIZE, FRAME_SIZE), (0, 2, 3, 1))
    patches = _im2col(x_nhwc).reshape(N_ITEMS * HW, PATCH_K).astype(jnp.bfloat16)
    conv = jnp.dot(patches, params["conv_w"].astype(jnp.bfloat16),
                   preferred_element_type=jnp.float32)
    conv = jnp.maximum(conv + params["conv_b"], 0.0)
    gap = jnp.mean(conv.reshape(N_ITEMS, HW, CONV_HIDDEN), axis=1)              # (N, Ch)
    feats = jnp.dot(gap, params["proj_w"]) + params["proj_b"]                   # (N, F)
    hfl = jnp.dot(feats, params["dimds_w"]) + params["dimds_b"]                 # (N, Fds)
    hb = hfl.reshape(BATCH_SIZE, FRAMES4ATTENTION, FEATURE_SIZE_DS)
    q = hb @ params["wq"]
    k = hb @ params["wk"]
    v = hb @ params["wv"]
    s = jnp.einsum("bqd,bkd->bqk", q, k) / math.sqrt(FEATURE_SIZE_DS)
    p = jax.nn.softmax(s, axis=-1)
    att = jnp.einsum("bqk,bkd->bqd", p, v)                                      # (B, A, Fds)
    zt = jnp.transpose(att, (0, 2, 1))                                          # (B, Fds, A)
    y3 = zt @ params["fc3_w"] + params["fc3_b"]                                 # (B, Fds, C)
    y3t = jnp.transpose(y3, (0, 2, 1))                                          # (B, C, Fds)
    y4 = y3t @ params["fc4_w"] + params["fc4_b"]                                # (B, C, 1)
    return y4


if __name__ == "__main__":
    key = jax.random.PRNGKey(0)
    pkey, xkey = jax.random.split(key)
    params = init_params(pkey)
    x = jax.random.normal(
        xkey, (BATCH_SIZE, FRAMES_SEQUENCE, 3, FRAME_SIZE, FRAME_SIZE), jnp.float32)

    out = jax.jit(bnet_forward)(x, params)
    out = jax.block_until_ready(out)
    assert out.shape == (BATCH_SIZE, N_CLASSES, 1), out.shape

    # Verify the algebraic folds (GAP-into-weight, proj/dim_ds/QKV, fc3/fc4 chain)
    # and block-mask attention against the unfused, transpose-based reference.
    # Tolerance covers bf16 MXU operands + approx softmax reciprocal.
    ref = bnet_reference(x, params)
    err = float(jnp.max(jnp.abs(out - ref)))
    assert err < 3e-2, f"kernel/reference mismatch: max abs err = {err}"

    print("KERNEL_OK")
</pallas_src>

<mosaic_0001>
module attributes {stable_mosaic.version = 11 : i64} {
  func.func @kernel(%arg0: memref<27x4096xbf16, #tpu.memory_space<vmem>>, %arg1: memref<40x128xf32, #tpu.memory_space<vmem>>, %arg2: memref<2x4xf32, #tpu.memory_space<vmem>>) attributes {dimension_semantics = [], scalar_prefetch = 0 : i64, scratch_operands = 0 : i64, tpu.core_type = #tpu.core_type<tc>} {
    %c0 = arith.constant 0 : index
    %c0_0 = arith.constant 0 : index
    %0 = vector.load %arg1[%c0, %c0_0] : memref<40x128xf32, #tpu.memory_space<vmem>>, vector<8x27xf32>
    %c0_1 = arith.constant 0 : index
    %c27 = arith.constant 27 : index
    %1 = vector.load %arg1[%c0_1, %c27] : memref<40x128xf32, #tpu.memory_space<vmem>>, vector<8x1xf32>
    %c8 = arith.constant 8 : index
    %c0_2 = arith.constant 0 : index
    %2 = vector.load %arg1[%c8, %c0_2] : memref<40x128xf32, #tpu.memory_space<vmem>>, vector<8x48xf32>
    %c16 = arith.constant 16 : index
    %c0_3 = arith.constant 0 : index
    %3 = vector.load %arg1[%c16, %c0_3] : memref<40x128xf32, #tpu.memory_space<vmem>>, vector<1x48xf32>
    %c17 = arith.constant 17 : index
    %c0_4 = arith.constant 0 : index
    %4 = vector.load %arg1[%c17, %c0_4] : memref<40x128xf32, #tpu.memory_space<vmem>>, vector<1x4xf32>
    %c18 = arith.constant 18 : index
    %c0_5 = arith.constant 0 : index
    %5 = vector.load %arg1[%c18, %c0_5] : memref<40x128xf32, #tpu.memory_space<vmem>>, vector<2x16xf32>
    %c24 = arith.constant 24 : index
    %c0_6 = arith.constant 0 : index
    %6 = vector.load %arg1[%c24, %c0_6] : memref<40x128xf32, #tpu.memory_space<vmem>>, vector<16x16xf32>
    %c24_7 = arith.constant 24 : index
    %c16_8 = arith.constant 16 : index
    %7 = vector.load %arg1[%c24_7, %c16_8] : memref<40x128xf32, #tpu.memory_space<vmem>>, vector<16x1xf32>
    %c24_9 = arith.constant 24 : index
    %c32 = arith.constant 32 : index
    %8 = vector.load %arg1[%c24_9, %c32] : memref<40x128xf32, #tpu.memory_space<vmem>>, vector<16x4xf32>
    %9 = arith.truncf %0 : vector<8x27xf32> to vector<8x27xbf16>
    %c0_10 = arith.constant 0 : index
    %c0_11 = arith.constant 0 : index
    %10 = vector.load %arg0[%c0_10, %c0_11] : memref<27x4096xbf16, #tpu.memory_space<vmem>>, vector<27x4096xbf16>
    %cst = arith.constant dense<0.000000e+00> : vector<8x4096xf32>
    %11 = tpu.matmul %9, %10, %cst {dimension_numbers = #tpu.dot_dimension_numbers<[1], [0], [0], [1], [0, 0, 1, 1], [], []>} : vector<8x27xbf16>, vector<27x4096xbf16>, vector<8x4096xf32> -> vector<8x4096xf32>
    %12 = vector.broadcast %1 : vector<8x1xf32> to vector<8x4096xf32>
    %13 = arith.addf %11, %12 : vector<8x4096xf32>
    %cst_12 = arith.constant 0.000000e+00 : f32
    %14 = vector.broadcast %cst_12 : f32 to vector<8x4096xf32>
    %15 = arith.maximumf %13, %14 : vector<8x4096xf32>
    %16 = tpu.iota {dimensions = array<i32: 1>} : vector<1x16xi32>
    %cst_13 = arith.constant 0.000000e+00 : f32
    %17 = vector.broadcast %cst_13 : f32 to vector<8x16xf32>
    %18 = vector.extract_strided_slice %15 {offsets = [0, 0], sizes = [8, 256], strides = [1, 1]} : vector<8x4096xf32> to vector<8x256xf32>
    %cst_14 = arith.constant dense<0.000000e+00> : vector<8xf32>
    %19 = vector.multi_reduction <add>, %18, %cst_14 [1] : vector<8x256xf32> to vector<8xf32>
    %20 = vector.shape_cast %19 : vector<8xf32> to vector<8x1xf32>
    %c0_i32 = arith.constant 0 : i32
    %21 = vector.broadcast %c0_i32 : i32 to vector<1x16xi32>
    %22 = arith.cmpi eq, %16, %21 : vector<1x16xi32>
    %cst_15 = arith.constant 0.000000e+00 : f32
    %23 = vector.shape_cast %22 : vector<1x16xi1> to vector<1x16xi1>
    %24 = vector.broadcast %23 : vector<1x16xi1> to vector<8x16xi1>
    %25 = vector.shape_cast %20 : vector<8x1xf32> to vector<8x1xf32>
    %26 = vector.broadcast %25 : vector<8x1xf32> to vector<8x16xf32>
    %27 = vector.broadcast %cst_15 : f32 to vector<8x16xf32>
    %28 = arith.select %24, %26, %27 : vector<8x16xi1>, vector<8x16xf32>
    %29 = arith.addf %17, %28 : vector<8x16xf32>
    %30 = vector.extract_strided_slice %15 {offsets = [0, 256], sizes = [8, 256], strides = [1, 1]} : vector<8x4096xf32> to vector<8x256xf32>
    %cst_16 = arith.constant dense<0.000000e+00> : vector<8xf32>
    %31 = vector.multi_reduction <add>, %30, %cst_16 [1] : vector<8x256xf32> to vector<8xf32>
    %32 = vector.shape_cast %31 : vector<8xf32> to vector<8x1xf32>
    %c1_i32 = arith.constant 1 : i32
    %33 = vector.broadcast %c1_i32 : i32 to vector<1x16xi32>
    %34 = arith.cmpi eq, %16, %33 : vector<1x16xi32>
    %cst_17 = arith.constant 0.000000e+00 : f32
    %35 = vector.shape_cast %34 : vector<1x16xi1> to vector<1x16xi1>
    %36 = vector.broadcast %35 : vector<1x16xi1> to vector<8x16xi1>
    %37 = vector.shape_cast %32 : vector<8x1xf32> to vector<8x1xf32>
    %38 = vector.broadcast %37 : vector<8x1xf32> to vector<8x16xf32>
    %39 = vector.broadcast %cst_17 : f32 to vector<8x16xf32>
    %40 = arith.select %36, %38, %39 : vector<8x16xi1>, vector<8x16xf32>
    %41 = arith.addf %29, %40 : vector<8x16xf32>
    %42 = vector.extract_strided_slice %15 {offsets = [0, 512], sizes = [8, 256], strides = [1, 1]} : vector<8x4096xf32> to vector<8x256xf32>
    %cst_18 = arith.constant dense<0.000000e+00> : vector<8xf32>
    %43 = vector.multi_reduction <add>, %42, %cst_18 [1] : vector<8x256xf32> to vector<8xf32>
    %44 = vector.shape_cast %43 : vector<8xf32> to vector<8x1xf32>
    %c2_i32 = arith.constant 2 : i32
    %45 = vector.broadcast %c2_i32 : i32 to vector<1x16xi32>
    %46 = arith.cmpi eq, %16, %45 : vector<1x16xi32>
    %cst_19 = arith.constant 0.000000e+00 : f32
    %47 = vector.shape_cast %46 : vector<1x16xi1> to vector<1x16xi1>
    %48 = vector.broadcast %47 : vector<1x16xi1> to vector<8x16xi1>
    %49 = vector.shape_cast %44 : vector<8x1xf32> to vector<8x1xf32>
    %50 = vector.broadcast %49 : vector<8x1xf32> to vector<8x16xf32>
    %51 = vector.broadcast %cst_19 : f32 to vector<8x16xf32>
    %52 = arith.select %48, %50, %51 : vector<8x16xi1>, vector<8x16xf32>
    %53 = arith.addf %41, %52 : vector<8x16xf32>
    %54 = vector.extract_strided_slice %15 {offsets = [0, 768], sizes = [8, 256], strides = [1, 1]} : vector<8x4096xf32> to vector<8x256xf32>
    %cst_20 = arith.constant dense<0.000000e+00> : vector<8xf32>
    %55 = vector.multi_reduction <add>, %54, %cst_20 [1] : vector<8x256xf32> to vector<8xf32>
    %56 = vector.shape_cast %55 : vector<8xf32> to vector<8x1xf32>
    %c3_i32 = arith.constant 3 : i32
    %57 = vector.broadcast %c3_i32 : i32 to vector<1x16xi32>
    %58 = arith.cmpi eq, %16, %57 : vector<1x16xi32>
    %cst_21 = arith.constant 0.000000e+00 : f32
    %59 = vector.shape_cast %58 : vector<1x16xi1> to vector<1x16xi1>
    %60 = vector.broadcast %59 : vector<1x16xi1> to vector<8x16xi1>
    %61 = vector.shape_cast %56 : vector<8x1xf32> to vector<8x1xf32>
    %62 = vector.broadcast %61 : vector<8x1xf32> to vector<8x16xf32>
    %63 = vector.broadcast %cst_21 : f32 to vector<8x16xf32>
    %64 = arith.select %60, %62, %63 : vector<8x16xi1>, vector<8x16xf32>
    %65 = arith.addf %53, %64 : vector<8x16xf32>
    %66 = vector.extract_strided_slice %15 {offsets = [0, 1024], sizes = [8, 256], strides = [1, 1]} : vector<8x4096xf32> to vector<8x256xf32>
    %cst_22 = arith.constant dense<0.000000e+00> : vector<8xf32>
    %67 = vector.multi_reduction <add>, %66, %cst_22 [1] : vector<8x256xf32> to vector<8xf32>
    %68 = vector.shape_cast %67 : vector<8xf32> to vector<8x1xf32>
    %c4_i32 = arith.constant 4 : i32
    %69 = vector.broadcast %c4_i32 : i32 to vector<1x16xi32>
    %70 = arith.cmpi eq, %16, %69 : vector<1x16xi32>
    %cst_23 = arith.constant 0.000000e+00 : f32
    %71 = vector.shape_cast %70 : vector<1x16xi1> to vector<1x16xi1>
    %72 = vector.broadcast %71 : vector<1x16xi1> to vector<8x16xi1>
    %73 = vector.shape_cast %68 : vector<8x1xf32> to vector<8x1xf32>
    %74 = vector.broadcast %73 : vector<8x1xf32> to vector<8x16xf32>
    %75 = vector.broadcast %cst_23 : f32 to vector<8x16xf32>
    %76 = arith.select %72, %74, %75 : vector<8x16xi1>, vector<8x16xf32>
    %77 = arith.addf %65, %76 : vector<8x16xf32>
    %78 = vector.extract_strided_slice %15 {offsets = [0, 1280], sizes = [8, 256], strides = [1, 1]} : vector<8x4096xf32> to vector<8x256xf32>
    %cst_24 = arith.constant dense<0.000000e+00> : vector<8xf32>
    %79 = vector.multi_reduction <add>, %78, %cst_24 [1] : vector<8x256xf32> to vector<8xf32>
    %80 = vector.shape_cast %79 : vector<8xf32> to vector<8x1xf32>
    %c5_i32 = arith.constant 5 : i32
    %81 = vector.broadcast %c5_i32 : i32 to vector<1x16xi32>
    %82 = arith.cmpi eq, %16, %81 : vector<1x16xi32>
    %cst_25 = arith.constant 0.000000e+00 : f32
    %83 = vector.shape_cast %82 : vector<1x16xi1> to vector<1x16xi1>
    %84 = vector.broadcast %83 : vector<1x16xi1> to vector<8x16xi1>
    %85 = vector.shape_cast %80 : vector<8x1xf32> to vector<8x1xf32>
    %86 = vector.broadcast %85 : vector<8x1xf32> to vector<8x16xf32>
    %87 = vector.broadcast %cst_25 : f32 to vector<8x16xf32>
    %88 = arith.select %84, %86, %87 : vector<8x16xi1>, vector<8x16xf32>
    %89 = arith.addf %77, %88 : vector<8x16xf32>
    %90 = vector.extract_strided_slice %15 {offsets = [0, 1536], sizes = [8, 256], strides = [1, 1]} : vector<8x4096xf32> to vector<8x256xf32>
    %cst_26 = arith.constant dense<0.000000e+00> : vector<8xf32>
    %91 = vector.multi_reduction <add>, %90, %cst_26 [1] : vector<8x256xf32> to vector<8xf32>
    %92 = vector.shape_cast %91 : vector<8xf32> to vector<8x1xf32>
    %c6_i32 = arith.constant 6 : i32
    %93 = vector.broadcast %c6_i32 : i32 to vector<1x16xi32>
    %94 = arith.cmpi eq, %16, %93 : vector<1x16xi32>
    %cst_27 = arith.constant 0.000000e+00 : f32
    %95 = vector.shape_cast %94 : vector<1x16xi1> to vector<1x16xi1>
    %96 = vector.broadcast %95 : vector<1x16xi1> to vector<8x16xi1>
    %97 = vector.shape_cast %92 : vector<8x1xf32> to vector<8x1xf32>
    %98 = vector.broadcast %97 : vector<8x1xf32> to vector<8x16xf32>
    %99 = vector.broadcast %cst_27 : f32 to vector<8x16xf32>
    %100 = arith.select %96, %98, %99 : vector<8x16xi1>, vector<8x16xf32>
    %101 = arith.addf %89, %100 : vector<8x16xf32>
    %102 = vector.extract_strided_slice %15 {offsets = [0, 1792], sizes = [8, 256], strides = [1, 1]} : vector<8x4096xf32> to vector<8x256xf32>
    %cst_28 = arith.constant dense<0.000000e+00> : vector<8xf32>
    %103 = vector.multi_reduction <add>, %102, %cst_28 [1] : vector<8x256xf32> to vector<8xf32>
    %104 = vector.shape_cast %103 : vector<8xf32> to vector<8x1xf32>
    %c7_i32 = arith.constant 7 : i32
    %105 = vector.broadcast %c7_i32 : i32 to vector<1x16xi32>
    %106 = arith.cmpi eq, %16, %105 : vector<1x16xi32>
    %cst_29 = arith.constant 0.000000e+00 : f32
    %107 = vector.shape_cast %106 : vector<1x16xi1> to vector<1x16xi1>
    %108 = vector.broadcast %107 : vector<1x16xi1> to vector<8x16xi1>
    %109 = vector.shape_cast %104 : vector<8x1xf32> to vector<8x1xf32>
    %110 = vector.broadcast %109 : vector<8x1xf32> to vector<8x16xf32>
    %111 = vector.broadcast %cst_29 : f32 to vector<8x16xf32>
    %112 = arith.select %108, %110, %111 : vector<8x16xi1>, vector<8x16xf32>
    %113 = arith.addf %101, %112 : vector<8x16xf32>
    %114 = vector.extract_strided_slice %15 {offsets = [0, 2048], sizes = [8, 256], strides = [1, 1]} : vector<8x4096xf32> to vector<8x256xf32>
    %cst_30 = arith.constant dense<0.000000e+00> : vector<8xf32>
    %115 = vector.multi_reduction <add>, %114, %cst_30 [1] : vector<8x256xf32> to vector<8xf32>
    %116 = vector.shape_cast %115 : vector<8xf32> to vector<8x1xf32>
    %c8_i32 = arith.constant 8 : i32
    %117 = vector.broadcast %c8_i32 : i32 to vector<1x16xi32>
    %118 = arith.cmpi eq, %16, %117 : vector<1x16xi32>
    %cst_31 = arith.constant 0.000000e+00 : f32
    %119 = vector.shape_cast %118 : vector<1x16xi1> to vector<1x16xi1>
    %120 = vector.broadcast %119 : vector<1x16xi1> to vector<8x16xi1>
    %121 = vector.shape_cast %116 : vector<8x1xf32> to vector<8x1xf32>
    %122 = vector.broadcast %121 : vector<8x1xf32> to vector<8x16xf32>
    %123 = vector.broadcast %cst_31 : f32 to vector<8x16xf32>
    %124 = arith.select %120, %122, %123 : vector<8x16xi1>, vector<8x16xf32>
    %125 = arith.addf %113, %124 : vector<8x16xf32>
    %126 = vector.extract_strided_slice %15 {offsets = [0, 2304], sizes = [8, 256], strides = [1, 1]} : vector<8x4096xf32> to vector<8x256xf32>
    %cst_32 = arith.constant dense<0.000000e+00> : vector<8xf32>
    %127 = vector.multi_reduction <add>, %126, %cst_32 [1] : vector<8x256xf32> to vector<8xf32>
    %128 = vector.shape_cast %127 : vector<8xf32> to vector<8x1xf32>
    %c9_i32 = arith.constant 9 : i32
    %129 = vector.broadcast %c9_i32 : i32 to vector<1x16xi32>
    %130 = arith.cmpi eq, %16, %129 : vector<1x16xi32>
    %cst_33 = arith.constant 0.000000e+00 : f32
    %131 = vector.shape_cast %130 : vector<1x16xi1> to vector<1x16xi1>
    %132 = vector.broadcast %131 : vector<1x16xi1> to vector<8x16xi1>
    %133 = vector.shape_cast %128 : vector<8x1xf32> to vector<8x1xf32>
    %134 = vector.broadcast %133 : vector<8x1xf32> to vector<8x16xf32>
    %135 = vector.broadcast %cst_33 : f32 to vector<8x16xf32>
    %136 = arith.select %132, %134, %135 : vector<8x16xi1>, vector<8x16xf32>
    %137 = arith.addf %125, %136 : vector<8x16xf32>
    %138 = vector.extract_strided_slice %15 {offsets = [0, 2560], sizes = [8, 256], strides = [1, 1]} : vector<8x4096xf32> to vector<8x256xf32>
    %cst_34 = arith.constant dense<0.000000e+00> : vector<8xf32>
    %139 = vector.multi_reduction <add>, %138, %cst_34 [1] : vector<8x256xf32> to vector<8xf32>
    %140 = vector.shape_cast %139 : vector<8xf32> to vector<8x1xf32>
    %c10_i32 = arith.constant 10 : i32
    %141 = vector.broadcast %c10_i32 : i32 to vector<1x16xi32>
    %142 = arith.cmpi eq, %16, %141 : vector<1x16xi32>
    %cst_35 = arith.constant 0.000000e+00 : f32
    %143 = vector.shape_cast %142 : vector<1x16xi1> to vector<1x16xi1>
    %144 = vector.broadcast %143 : vector<1x16xi1> to vector<8x16xi1>
    %145 = vector.shape_cast %140 : vector<8x1xf32> to vector<8x1xf32>
    %146 = vector.broadcast %145 : vector<8x1xf32> to vector<8x16xf32>
    %147 = vector.broadcast %cst_35 : f32 to vector<8x16xf32>
    %148 = arith.select %144, %146, %147 : vector<8x16xi1>, vector<8x16xf32>
    %149 = arith.addf %137, %148 : vector<8x16xf32>
    %150 = vector.extract_strided_slice %15 {offsets = [0, 2816], sizes = [8, 256], strides = [1, 1]} : vector<8x4096xf32> to vector<8x256xf32>
    %cst_36 = arith.constant dense<0.000000e+00> : vector<8xf32>
    %151 = vector.multi_reduction <add>, %150, %cst_36 [1] : vector<8x256xf32> to vector<8xf32>
    %152 = vector.shape_cast %151 : vector<8xf32> to vector<8x1xf32>
    %c11_i32 = arith.constant 11 : i32
    %153 = vector.broadcast %c11_i32 : i32 to vector<1x16xi32>
    %154 = arith.cmpi eq, %16, %153 : vector<1x16xi32>
    %cst_37 = arith.constant 0.000000e+00 : f32
    %155 = vector.shape_cast %154 : vector<1x16xi1> to vector<1x16xi1>
    %156 = vector.broadcast %155 : vector<1x16xi1> to vector<8x16xi1>
    %157 = vector.shape_cast %152 : vector<8x1xf32> to vector<8x1xf32>
    %158 = vector.broadcast %157 : vector<8x1xf32> to vector<8x16xf32>
    %159 = vector.broadcast %cst_37 : f32 to vector<8x16xf32>
    %160 = arith.select %156, %158, %159 : vector<8x16xi1>, vector<8x16xf32>
    %161 = arith.addf %149, %160 : vector<8x16xf32>
    %162 = vector.extract_strided_slice %15 {offsets = [0, 3072], sizes = [8, 256], strides = [1, 1]} : vector<8x4096xf32> to vector<8x256xf32>
    %cst_38 = arith.constant dense<0.000000e+00> : vector<8xf32>
    %163 = vector.multi_reduction <add>, %162, %cst_38 [1] : vector<8x256xf32> to vector<8xf32>
    %164 = vector.shape_cast %163 : vector<8xf32> to vector<8x1xf32>
    %c12_i32 = arith.constant 12 : i32
    %165 = vector.broadcast %c12_i32 : i32 to vector<1x16xi32>
    %166 = arith.cmpi eq, %16, %165 : vector<1x16xi32>
    %cst_39 = arith.constant 0.000000e+00 : f32
    %167 = vector.shape_cast %166 : vector<1x16xi1> to vector<1x16xi1>
    %168 = vector.broadcast %167 : vector<1x16xi1> to vector<8x16xi1>
    %169 = vector.shape_cast %164 : vector<8x1xf32> to vector<8x1xf32>
    %170 = vector.broadcast %169 : vector<8x1xf32> to vector<8x16xf32>
    %171 = vector.broadcast %cst_39 : f32 to vector<8x16xf32>
    %172 = arith.select %168, %170, %171 : vector<8x16xi1>, vector<8x16xf32>
    %173 = arith.addf %161, %172 : vector<8x16xf32>
    %174 = vector.extract_strided_slice %15 {offsets = [0, 3328], sizes = [8, 256], strides = [1, 1]} : vector<8x4096xf32> to vector<8x256xf32>
    %cst_40 = arith.constant dense<0.000000e+00> : vector<8xf32>
    %175 = vector.multi_reduction <add>, %174, %cst_40 [1] : vector<8x256xf32> to vector<8xf32>
    %176 = vector.shape_cast %175 : vector<8xf32> to vector<8x1xf32>
    %c13_i32 = arith.constant 13 : i32
    %177 = vector.broadcast %c13_i32 : i32 to vector<1x16xi32>
    %178 = arith.cmpi eq, %16, %177 : vector<1x16xi32>
    %cst_41 = arith.constant 0.000000e+00 : f32
    %179 = vector.shape_cast %178 : vector<1x16xi1> to vector<1x16xi1>
    %180 = vector.broadcast %179 : vector<1x16xi1> to vector<8x16xi1>
    %181 = vector.shape_cast %176 : vector<8x1xf32> to vector<8x1xf32>
    %182 = vector.broadcast %181 : vector<8x1xf32> to vector<8x16xf32>
    %183 = vector.broadcast %cst_41 : f32 to vector<8x16xf32>
    %184 = arith.select %180, %182, %183 : vector<8x16xi1>, vector<8x16xf32>
    %185 = arith.addf %173, %184 : vector<8x16xf32>
    %186 = vector.extract_strided_slice %15 {offsets = [0, 3584], sizes = [8, 256], strides = [1, 1]} : vector<8x4096xf32> to vector<8x256xf32>
    %cst_42 = arith.constant dense<0.000000e+00> : vector<8xf32>
    %187 = vector.multi_reduction <add>, %186, %cst_42 [1] : vector<8x256xf32> to vector<8xf32>
    %188 = vector.shape_cast %187 : vector<8xf32> to vector<8x1xf32>
    %c14_i32 = arith.constant 14 : i32
    %189 = vector.broadcast %c14_i32 : i32 to vector<1x16xi32>
    %190 = arith.cmpi eq, %16, %189 : vector<1x16xi32>
    %cst_43 = arith.constant 0.000000e+00 : f32
    %191 = vector.shape_cast %190 : vector<1x16xi1> to vector<1x16xi1>
    %192 = vector.broadcast %191 : vector<1x16xi1> to vector<8x16xi1>
    %193 = vector.shape_cast %188 : vector<8x1xf32> to vector<8x1xf32>
    %194 = vector.broadcast %193 : vector<8x1xf32> to vector<8x16xf32>
    %195 = vector.broadcast %cst_43 : f32 to vector<8x16xf32>
    %196 = arith.select %192, %194, %195 : vector<8x16xi1>, vector<8x16xf32>
    %197 = arith.addf %185, %196 : vector<8x16xf32>
    %198 = vector.extract_strided_slice %15 {offsets = [0, 3840], sizes = [8, 256], strides = [1, 1]} : vector<8x4096xf32> to vector<8x256xf32>
    %cst_44 = arith.constant dense<0.000000e+00> : vector<8xf32>
    %199 = vector.multi_reduction <add>, %198, %cst_44 [1] : vector<8x256xf32> to vector<8xf32>
    %200 = vector.shape_cast %199 : vector<8xf32> to vector<8x1xf32>
    %c15_i32 = arith.constant 15 : i32
    %201 = vector.broadcast %c15_i32 : i32 to vector<1x16xi32>
    %202 = arith.cmpi eq, %16, %201 : vector<1x16xi32>
    %cst_45 = arith.constant 0.000000e+00 : f32
    %203 = vector.shape_cast %202 : vector<1x16xi1> to vector<1x16xi1>
    %204 = vector.broadcast %203 : vector<1x16xi1> to vector<8x16xi1>
    %205 = vector.shape_cast %200 : vector<8x1xf32> to vector<8x1xf32>
    %206 = vector.broadcast %205 : vector<8x1xf32> to vector<8x16xf32>
    %207 = vector.broadcast %cst_45 : f32 to vector<8x16xf32>
    %208 = arith.select %204, %206, %207 : vector<8x16xi1>, vector<8x16xf32>
    %209 = arith.addf %197, %208 : vector<8x16xf32>
    %210 = arith.truncf %209 : vector<8x16xf32> to vector<8x16xbf16>
    %211 = arith.truncf %2 : vector<8x48xf32> to vector<8x48xbf16>
    %cst_46 = arith.constant dense<0.000000e+00> : vector<16x48xf32>
    %212 = tpu.matmul %210, %211, %cst_46 {dimension_numbers = #tpu.dot_dimension_numbers<[0], [0], [1], [1], [0, 1, 1, 1], [], []>} : vector<8x16xbf16>, vector<8x48xbf16>, vector<16x48xf32> -> vector<16x48xf32>
    %213 = vector.broadcast %3 : vector<1x48xf32> to vector<16x48xf32>
    %214 = arith.addf %212, %213 : vector<16x48xf32>
    %215 = vector.extract_strided_slice %214 {offsets = [0, 0], sizes = [16, 16], strides = [1, 1]} : vector<16x48xf32> to vector<16x16xf32>
    %216 = vector.extract_strided_slice %214 {offsets = [0, 16], sizes = [16, 16], strides = [1, 1]} : vector<16x48xf32> to vector<16x16xf32>
    %217 = vector.extract_strided_slice %214 {offsets = [0, 32], sizes = [16, 16], strides = [1, 1]} : vector<16x48xf32> to vector<16x16xf32>
    %218 = arith.truncf %215 : vector<16x16xf32> to vector<16x16xbf16>
    %219 = arith.truncf %216 : vector<16x16xf32> to vector<16x16xbf16>
    %cst_47 = arith.constant dense<0.000000e+00> : vector<16x16xf32>
    %220 = tpu.matmul %218, %219, %cst_47 {dimension_numbers = #tpu.dot_dimension_numbers<[1], [1], [0], [0], [0, 0, 1, 0], [], []>} : vector<16x16xbf16>, vector<16x16xbf16>, vector<16x16xf32> -> vector<16x16xf32>
    %cst_48 = arith.constant 2.500000e-01 : f32
    %221 = vector.broadcast %cst_48 : f32 to vector<16x16xf32>
    %222 = arith.mulf %220, %221 : vector<16x16xf32>
    %223 = arith.addf %222, %6 : vector<16x16xf32>
    %cst_49 = arith.constant dense<0xFF800000> : vector<16xf32>
    %224 = vector.multi_reduction <maximumf>, %223, %cst_49 [1] : vector<16x16xf32> to vector<16xf32>
    %225 = vector.shape_cast %224 : vector<16xf32> to vector<16x1xf32>
    %226 = vector.broadcast %225 : vector<16x1xf32> to vector<16x16xf32>
    %227 = arith.subf %223, %226 : vector<16x16xf32>
    %228 = math.exp %227 : vector<16x16xf32>
    %cst_50 = arith.constant dense<0.000000e+00> : vector<16xf32>
    %229 = vector.multi_reduction <add>, %228, %cst_50 [1] : vector<16x16xf32> to vector<16xf32>
    %230 = vector.shape_cast %229 : vector<16xf32> to vector<16x1xf32>
    %231 = tpu.reciprocal %230 {approx = true} : vector<16x1xf32> -> vector<16x1xf32>
    %232 = vector.broadcast %231 : vector<16x1xf32> to vector<16x16xf32>
    %233 = arith.mulf %228, %232 : vector<16x16xf32>
    %234 = arith.truncf %233 : vector<16x16xf32> to vector<16x16xbf16>
    %235 = arith.truncf %217 : vector<16x16xf32> to vector<16x16xbf16>
    %cst_51 = arith.constant dense<0.000000e+00> : vector<16x16xf32>
    %236 = tpu.matmul %234, %235, %cst_51 {dimension_numbers = #tpu.dot_dimension_numbers<[1], [0], [0], [1], [0, 0, 1, 1], [], []>} : vector<16x16xbf16>, vector<16x16xbf16>, vector<16x16xf32> -> vector<16x16xf32>
    %cst_52 = arith.constant dense<0.000000e+00> : vector<16x1xf32>
    %237 = tpu.matmul %236, %7, %cst_52 {dimension_numbers = #tpu.dot_dimension_numbers<[1], [0], [0], [1], [0, 0, 1, 1], [], []>} : vector<16x16xf32>, vector<16x1xf32>, vector<16x1xf32> -> vector<16x1xf32>
    %238 = vector.broadcast %237 : vector<16x1xf32> to vector<16x4xf32>
    %239 = arith.mulf %8, %238 : vector<16x4xf32>
    %cst_53 = arith.constant dense<0.000000e+00> : vector<2x4xf32>
    %240 = tpu.matmul %5, %239, %cst_53 {dimension_numbers = #tpu.dot_dimension_numbers<[1], [0], [0], [1], [0, 0, 1, 1], [], []>} : vector<2x16xf32>, vector<16x4xf32>, vector<2x4xf32> -> vector<2x4xf32>
    %241 = vector.broadcast %4 : vector<1x4xf32> to vector<2x4xf32>
    %242 = arith.addf %240, %241 : vector<2x4xf32>
    %c0_54 = arith.constant 0 : index
    %c0_55 = arith.constant 0 : index
    %243 = vector.load %arg2[%c0_54, %c0_55] : memref<2x4xf32, #tpu.memory_space<vmem>>, vector<2x4xf32>
    tpu.vector_store %arg2[%c0_54, %c0_55], %242 {strides = array<i32>} : memref<2x4xf32, #tpu.memory_space<vmem>>, vector<2x4xf32>,
    return
  }
}

</mosaic_0001>

<llo_original>
// kernel: bnet_forward.1
$region0: #{bnet_forward.1}
  #allocation0 [shape = 'u32[]', space=smem, size = 0x4, offset = 0x4, fixed_abs, tag = 'smem constant byte address 0x4 - core index']
  #allocation1 [shape = 'u32[144,128]{1,0:T(1,128)}', space=vmem, size = 0x12000, scoped, tag = 'internal scratch']
  %s0 = inlined_call_operand.vmem [shape: bf16[27,4096], index: 0, kind: input, shape index: {}]
  %s1 = inlined_call_operand.vmem [shape: f32[40,128], index: 1, kind: input, shape index: {}]
  %s2 = inlined_call_operand.hbm [shape: f32[2,4], index: 2, kind: output, shape index: {}]
  %s3 = sld [smem:[#allocation0]]
  $region18: #{bnet_forward.1} parent=0
    _
  %s5 = ssub.s32 1, %s3
  %s6 = scalar_select 0, %s5, %s3
  $region1: #{bnet_forward.1} parent=0
    #allocation2 [shape = 'u8[1024]{0}', space=vmem, size = 0x400, scoped, tag = 'output window, operand 0, single buffered']
    #allocation3 [shape = 's32[1]{0}', space=sflag, size = 0x4, scoped, tag = 'scoped memory for bnet_forward.1']
    %7 = vsyncpa [#allocation3], 0
    // Predicated region
    $region2: #{bnet_forward.1} parent=1 // pred_check
      _
    $region3: #{bnet_forward.1} parent=1 // pred_check_branch
      %9 = sbr.rel (0) target = $region5
    $region4: #{bnet_forward.1} parent=1 // pred_region
      _
    $region5: #{bnet_forward.1} parent=1 // pred_fallthru
      _
    // Predicated region
    $region6: #{bnet_forward.1} parent=1 // pred_check
      _
    $region7: #{bnet_forward.1} parent=1 // pred_check_branch
      %11 = sbr.rel (0) target = $region9
    $region8: #{bnet_forward.1} parent=1 // pred_region
      _
    $region9: #{bnet_forward.1} parent=1 // pred_fallthru
      _
    %v13 = vld [vmem:[%s1] sm:$0xff]
    %v14 = vld [vmem:[%s1 + $0x8] sm:$0xff]
    %v15 = vld [vmem:[%s1 + $0x10] sm:$0x1]
    %v16 = vld [vmem:[%s1 + $0x11] sm:$0x1]
    %v17 = vld [vmem:[%s1 + $0x12] sm:$0x3]
    %v18 = vld [vmem:[%s1 + $0x18] sm:$0xff]
    %v19 = vld [vmem:[%s1 + $0x20] sm:$0xff]
    %v20 = vpack.c.bf16 %v13, %v13
    %v21 = vld [vmem:[%s0] sm:$0xff]
    %v22 = vld [vmem:[%s0 + $0x8] sm:$0xff]
    %v23 = vld [vmem:[%s0 + $0x10] sm:$0xff]
    %v24 = vld [vmem:[%s0 + $0x18] sm:$0xff]
    %v25 = vld [vmem:[%s0 + $0x20] sm:$0xff]
    %v26 = vld [vmem:[%s0 + $0x28] sm:$0xff]
    %v27 = vld [vmem:[%s0 + $0x30] sm:$0xff]
    %v28 = vld [vmem:[%s0 + $0x38] sm:$0xff]
    %v29 = vld [vmem:[%s0 + $0x40] sm:$0xff]
    %v30 = vld [vmem:[%s0 + $0x48] sm:$0xff]
    %v31 = vld [vmem:[%s0 + $0x50] sm:$0xff]
    %v32 = vld [vmem:[%s0 + $0x58] sm:$0xff]
    %v33 = vld [vmem:[%s0 + $0x60] sm:$0xff]
    %v34 = vld [vmem:[%s0 + $0x68] sm:$0xff]
    %v35 = vld [vmem:[%s0 + $0x70] sm:$0xff]
    %v36 = vld [vmem:[%s0 + $0x78] sm:$0xff]
    %v37 = vld [vmem:[%s0 + $0x80] sm:$0xff]
    %v38 = vld [vmem:[%s0 + $0x88] sm:$0xff]
    %v39 = vld [vmem:[%s0 + $0x90] sm:$0xff]
    %v40 = vld [vmem:[%s0 + $0x98] sm:$0xff]
    %v41 = vld [vmem:[%s0 + $0xa0] sm:$0xff]
    %v42 = vld [vmem:[%s0 + $0xa8] sm:$0xff]
    %v43 = vld [vmem:[%s0 + $0xb0] sm:$0xff]
    %v44 = vld [vmem:[%s0 + $0xb8] sm:$0xff]
    %v45 = vld [vmem:[%s0 + $0xc0] sm:$0xff]
    %v46 = vld [vmem:[%s0 + $0xc8] sm:$0xff]
    %v47 = vld [vmem:[%s0 + $0xd0] sm:$0xff]
    %v48 = vld [vmem:[%s0 + $0xd8] sm:$0xff]
    %v49 = vld [vmem:[%s0 + $0xe0] sm:$0xff]
    %v50 = vld [vmem:[%s0 + $0xe8] sm:$0xff]
    %v51 = vld [vmem:[%s0 + $0xf0] sm:$0xff]
    %v52 = vld [vmem:[%s0 + $0xf8] sm:$0xff]
    %v53 = vld [vmem:[%s0 + $0x100] sm:$0xff]
    %v54 = vld [vmem:[%s0 + $0x108] sm:$0xff]
    %v55 = vld [vmem:[%s0 + $0x110] sm:$0xff]
    %v56 = vld [vmem:[%s0 + $0x118] sm:$0xff]
    %v57 = vld [vmem:[%s0 + $0x120] sm:$0xff]
    %v58 = vld [vmem:[%s0 + $0x128] sm:$0xff]
    %v59 = vld [vmem:[%s0 + $0x130] sm:$0xff]
    %v60 = vld [vmem:[%s0 + $0x138] sm:$0xff]
    %v61 = vld [vmem:[%s0 + $0x140] sm:$0xff]
    %v62 = vld [vmem:[%s0 + $0x148] sm:$0xff]
    %v63 = vld [vmem:[%s0 + $0x150] sm:$0xff]
    %v64 = vld [vmem:[%s0 + $0x158] sm:$0xff]
    %v65 = vld [vmem:[%s0 + $0x160] sm:$0xff]
    %v66 = vld [vmem:[%s0 + $0x168] sm:$0xff]
    %v67 = vld [vmem:[%s0 + $0x170] sm:$0xff]
    %v68 = vld [vmem:[%s0 + $0x178] sm:$0xff]
    %v69 = vld [vmem:[%s0 + $0x180] sm:$0x33]
    %v70 = vld [vmem:[%s0 + $0x188] sm:$0x33]
    %v71 = vld [vmem:[%s0 + $0x190] sm:$0x33]
    %v72 = vld [vmem:[%s0 + $0x198] sm:$0x33]
    %v73 = vld [vmem:[%s0 + $0x1a0] sm:$0x33]
    %v74 = vld [vmem:[%s0 + $0x1a8] sm:$0x33]
    %v75 = vld [vmem:[%s0 + $0x1b0] sm:$0x33]
    %v76 = vld [vmem:[%s0 + $0x1b8] sm:$0x33]
    %v77 = vld [vmem:[%s0 + $0x1c0] sm:$0x33]
    %v78 = vld [vmem:[%s0 + $0x1c8] sm:$0x33]
    %v79 = vld [vmem:[%s0 + $0x1d0] sm:$0x33]
    %v80 = vld [vmem:[%s0 + $0x1d8] sm:$0x33]
    %v81 = vld [vmem:[%s0 + $0x1e0] sm:$0x33]
    %v82 = vld [vmem:[%s0 + $0x1e8] sm:$0x33]
    %v83 = vld [vmem:[%s0 + $0x1f0] sm:$0x33]
    %v84 = vld [vmem:[%s0 + $0x1f8] sm:$0x33]
    %86 = vset.pattern.permute.xlu0 27
    %87 = vperm.xlu0 %86, %v13
    %v88 = vpop.permute.xlu0 %87
    %v154 = vunpack.c.l.b16 %v21
    %v155 = vunpack.c.h.b16 %v21
    %v156 = vunpack.c.l.b16 %v22
    %v157 = vunpack.c.h.b16 %v22
    %v158 = vunpack.c.l.b16 %v23
    %v159 = vunpack.c.h.b16 %v23
    %v160 = vunpack.c.l.b16 %v24
    %v161 = vunpack.c.h.b16 %v24
    %v162 = vunpack.c.l.b16 %v25
    %v163 = vunpack.c.h.b16 %v25
    %v164 = vunpack.c.l.b16 %v26
    %v165 = vunpack.c.h.b16 %v26
    %v166 = vunpack.c.l.b16 %v27
    %v167 = vunpack.c.h.b16 %v27
    %v168 = vunpack.c.l.b16 %v28
    %v169 = vunpack.c.h.b16 %v28
    %v170 = vunpack.c.l.b16 %v29
    %v171 = vunpack.c.h.b16 %v29
    %v172 = vunpack.c.l.b16 %v30
    %v173 = vunpack.c.h.b16 %v30
    %v174 = vunpack.c.l.b16 %v31
    %v175 = vunpack.c.h.b16 %v31
    %v176 = vunpack.c.l.b16 %v32
    %v177 = vunpack.c.h.b16 %v32
    %v178 = vunpack.c.l.b16 %v33
    %v179 = vunpack.c.h.b16 %v33
    %v180 = vunpack.c.l.b16 %v34
    %v181 = vunpack.c.h.b16 %v34
    %v182 = vunpack.c.l.b16 %v35
    %v183 = vunpack.c.h.b16 %v35
    %v184 = vunpack.c.l.b16 %v36
    %v185 = vunpack.c.h.b16 %v36
    %v186 = vunpack.c.l.b16 %v37
    %v187 = vunpack.c.h.b16 %v37
    %v188 = vunpack.c.l.b16 %v38
    %v189 = vunpack.c.h.b16 %v38
    %v190 = vunpack.c.l.b16 %v39
    %v191 = vunpack.c.h.b16 %v39
    %v192 = vunpack.c.l.b16 %v40
    %v193 = vunpack.c.h.b16 %v40
    %v194 = vunpack.c.l.b16 %v41
    %v195 = vunpack.c.h.b16 %v41
    %v196 = vunpack.c.l.b16 %v42
    %v197 = vunpack.c.h.b16 %v42
    %v198 = vunpack.c.l.b16 %v43
    %v199 = vunpack.c.h.b16 %v43
    %v200 = vunpack.c.l.b16 %v44
    %v201 = vunpack.c.h.b16 %v44
    %v202 = vunpack.c.l.b16 %v45
    %v203 = vunpack.c.h.b16 %v45
    %v204 = vunpack.c.l.b16 %v46
    %v205 = vunpack.c.h.b16 %v46
    %v206 = vunpack.c.l.b16 %v47
    %v207 = vunpack.c.h.b16 %v47
    %v208 = vunpack.c.l.b16 %v48
    %v209 = vunpack.c.h.b16 %v48
    %v210 = vunpack.c.l.b16 %v49
    %v211 = vunpack.c.h.b16 %v49
    %v212 = vunpack.c.l.b16 %v50
    %v213 = vunpack.c.h.b16 %v50
    %v214 = vunpack.c.l.b16 %v51
    %v215 = vunpack.c.h.b16 %v51
    %v216 = vunpack.c.l.b16 %v52
    %v217 = vunpack.c.h.b16 %v52
    %v218 = vunpack.c.l.b16 %v53
    %v219 = vunpack.c.h.b16 %v53
    %v220 = vunpack.c.l.b16 %v54
    %v221 = vunpack.c.h.b16 %v54
    %v222 = vunpack.c.l.b16 %v55
    %v223 = vunpack.c.h.b16 %v55
    %v224 = vunpack.c.l.b16 %v56
    %v225 = vunpack.c.h.b16 %v56
    %v226 = vunpack.c.l.b16 %v57
    %v227 = vunpack.c.h.b16 %v57
    %v228 = vunpack.c.l.b16 %v58
    %v229 = vunpack.c.h.b16 %v58
    %v230 = vunpack.c.l.b16 %v59
    %v231 = vunpack.c.h.b16 %v59
    %v232 = vunpack.c.l.b16 %v60
    %v233 = vunpack.c.h.b16 %v60
    %v234 = vunpack.c.l.b16 %v61
    %v235 = vunpack.c.h.b16 %v61
    %v236 = vunpack.c.l.b16 %v62
    %v237 = vunpack.c.h.b16 %v62
    %v238 = vunpack.c.l.b16 %v63
    %v239 = vunpack.c.h.b16 %v63
    %v240 = vunpack.c.l.b16 %v64
    %v241 = vunpack.c.h.b16 %v64
    %v242 = vunpack.c.l.b16 %v65
    %v243 = vunpack.c.h.b16 %v65
    %v244 = vunpack.c.l.b16 %v66
    %v245 = vunpack.c.h.b16 %v66
    %v246 = vunpack.c.l.b16 %v67
    %v247 = vunpack.c.h.b16 %v67
    %v248 = vunpack.c.l.b16 %v68
    %v249 = vunpack.c.h.b16 %v68
    %v250 = vunpack.c.l.b16 %v69
    %v251 = vunpack.c.h.b16 %v69
    %v252 = vunpack.c.l.b16 %v70
    %v253 = vunpack.c.h.b16 %v70
    %v254 = vunpack.c.l.b16 %v71
    %v255 = vunpack.c.h.b16 %v71
    %v256 = vunpack.c.l.b16 %v72
    %v257 = vunpack.c.h.b16 %v72
    %v258 = vunpack.c.l.b16 %v73
    %v259 = vunpack.c.h.b16 %v73
    %v260 = vunpack.c.l.b16 %v74
    %v261 = vunpack.c.h.b16 %v74
    %v262 = vunpack.c.l.b16 %v75
    %v263 = vunpack.c.h.b16 %v75
    %v264 = vunpack.c.l.b16 %v76
    %v265 = vunpack.c.h.b16 %v76
    %v266 = vunpack.c.l.b16 %v77
    %v267 = vunpack.c.h.b16 %v77
    %v268 = vunpack.c.l.b16 %v78
    %v269 = vunpack.c.h.b16 %v78
    %v270 = vunpack.c.l.b16 %v79
    %v271 = vunpack.c.h.b16 %v79
    %v272 = vunpack.c.l.b16 %v80
    %v273 = vunpack.c.h.b16 %v80
    %v274 = vunpack.c.l.b16 %v81
    %v275 = vunpack.c.h.b16 %v81
    %v276 = vunpack.c.l.b16 %v82
    %v277 = vunpack.c.h.b16 %v82
    %v278 = vunpack.c.l.b16 %v83
    %v279 = vunpack.c.h.b16 %v83
    %v280 = vunpack.c.l.b16 %v84
    %v281 = vunpack.c.h.b16 %v84
    %v282 = vpack.c.b16 %v186, %v154
    %v283 = vpack.c.b16 %v187, %v155
    %v284 = vpack.c.b16 %v188, %v156
    %v285 = vpack.c.b16 %v189, %v157
    %v286 = vpack.c.b16 %v190, %v158
    %v287 = vpack.c.b16 %v191, %v159
    %v288 = vpack.c.b16 %v192, %v160
    %v289 = vpack.c.b16 %v193, %v161
    %v290 = vpack.c.b16 %v194, %v162
    %v291 = vpack.c.b16 %v195, %v163
    %v292 = vpack.c.b16 %v196, %v164
    %v293 = vpack.c.b16 %v197, %v165
    %v294 = vpack.c.b16 %v198, %v166
    %v295 = vpack.c.b16 %v199, %v167
    %v296 = vpack.c.b16 %v200, %v168
    %v297 = vpack.c.b16 %v201, %v169
    %v298 = vpack.c.b16 %v202, %v170
    %v299 = vpack.c.b16 %v203, %v171
    %v300 = vpack.c.b16 %v204, %v172
    %v301 = vpack.c.b16 %v205, %v173
    %v302 = vpack.c.b16 %v206, %v174
    %v303 = vpack.c.b16 %v207, %v175
    %v304 = vpack.c.b16 %v208, %v176
    %v305 = vpack.c.b16 %v209, %v177
    %v306 = vpack.c.b16 %v210, %v178
    %v307 = vpack.c.b16 %v211, %v179
    %v308 = vpack.c.b16 %v212, %v180
    %v309 = vpack.c.b16 %v213, %v181
    %v310 = vpack.c.b16 %v214, %v182
    %v311 = vpack.c.b16 %v215, %v183
    %v312 = vpack.c.b16 %v216, %v184
    %v313 = vpack.c.b16 %v217, %v185
    %v314 = vpack.c.b16 %v250, %v218
    %v315 = vpack.c.b16 %v251, %v219
    %v316 = vpack.c.b16 %v252, %v220
    %v317 = vpack.c.b16 %v253, %v221
    %v318 = vpack.c.b16 %v254, %v222
    %v319 = vpack.c.b16 %v255, %v223
    %v320 = vpack.c.b16 %v256, %v224
    %v321 = vpack.c.b16 %v257, %v225
    %v322 = vpack.c.b16 %v258, %v226
    %v323 = vpack.c.b16 %v259, %v227
    %v324 = vpack.c.b16 %v260, %v228
    %v325 = vpack.c.b16 %v261, %v229
    %v326 = vpack.c.b16 %v262, %v230
    %v327 = vpack.c.b16 %v263, %v231
    %v328 = vpack.c.b16 %v264, %v232
    %v329 = vpack.c.b16 %v265, %v233
    %v330 = vpack.c.b16 %v266, %v234
    %v331 = vpack.c.b16 %v267, %v235
    %v332 = vpack.c.b16 %v268, %v236
    %v333 = vpack.c.b16 %v269, %v237
    %v334 = vpack.c.b16 %v270, %v238
    %v335 = vpack.c.b16 %v271, %v239
    %v336 = vpack.c.b16 %v272, %v240
    %v337 = vpack.c.b16 %v273, %v241
    %v338 = vpack.c.b16 %v274, %v242
    %v339 = vpack.c.b16 %v275, %v243
    %v340 = vpack.c.b16 %v276, %v244
    %v341 = vpack.c.b16 %v277, %v245
    %v342 = vpack.c.b16 %v278, %v246
    %v343 = vpack.c.b16 %v279, %v247
    %v344 = vpack.c.b16 %v280, %v248
    %v345 = vpack.c.b16 %v281, %v249
    %vm378 = vcmask 220160
    %v380 = vsel %vm378, %v20, 0
    %vm382 = vcmask 1044480
    %vm383 = vcmask 1045504
    %v384 = vsel %vm382, 4294967295, 65535
    %v385 = vsel %vm383, %v384, 0
    %v387 = vand.u32 %v314, %v385
    %v390 = vand.u32 %v315, %v385
    %v393 = vand.u32 %v316, %v385
    %v396 = vand.u32 %v317, %v385
    %v399 = vand.u32 %v318, %v385
    %v402 = vand.u32 %v319, %v385
    %v405 = vand.u32 %v320, %v385
    %v408 = vand.u32 %v321, %v385
    %v411 = vand.u32 %v322, %v385
    %v414 = vand.u32 %v323, %v385
    %v417 = vand.u32 %v324, %v385
    %v420 = vand.u32 %v325, %v385
    %v423 = vand.u32 %v326, %v385
    %v426 = vand.u32 %v327, %v385
    %v429 = vand.u32 %v328, %v385
    %v432 = vand.u32 %v329, %v385
    %v435 = vand.u32 %v330, %v385
    %v438 = vand.u32 %v331, %v385
    %v441 = vand.u32 %v332, %v385
    %v444 = vand.u32 %v333, %v385
    %v447 = vand.u32 %v334, %v385
    %v450 = vand.u32 %v335, %v385
    %v453 = vand.u32 %v336, %v385
    %v456 = vand.u32 %v337, %v385
    %v459 = vand.u32 %v338, %v385
    %v462 = vand.u32 %v339, %v385
    %v465 = vand.u32 %v340, %v385
    %v468 = vand.u32 %v341, %v385
    %v471 = vand.u32 %v342, %v385
    %v474 = vand.u32 %v343, %v385
    %v477 = vand.u32 %v344, %v385
    %v480 = vand.u32 %v345, %v385
    %482 = vmatprep.subr.bf16.mxu0 %v283
    %483 = vmatpush1.bf16.msra.mxu0 %v282
    %484 = vmatprep.subr.bf16.mxu0 %v390
    %485 = vmatpush1.bf16.msra.mxu0 %v387
    %486 = vmatprep.subr.bf16.mxu0 0
    %487 = vmatpush1.bf16.msra.mxu0 0
    %488 = vmatprep.subr.bf16.mxu0 0
    %489 = vmatpush1.bf16.msra.mxu0 0
    %490 = vmatprep.subr.bf16.mxu0 0
    %491 = vmatpush1.bf16.msra.mxu0 0
    %492 = vmatprep.subr.bf16.mxu0 0
    %493 = vmatpush1.bf16.msra.mxu0 0
    %494 = vmatprep.subr.bf16.mxu0 0
    %495 = vmatpush1.bf16.msra.mxu0 0
    %496 = vmatprep.subr.bf16.mxu0 0
    %497 = vmatpush1.bf16.msra.mxu0 0
    %498 = vmatprep.subr.bf16.mxu0 0
    %499 = vmatpush1.bf16.msra.mxu0 0
    %500 = vmatprep.subr.bf16.mxu0 0
    %501 = vmatpush1.bf16.msra.mxu0 0
    %502 = vmatprep.subr.bf16.mxu0 0
    %503 = vmatpush1.bf16.msra.mxu0 0
    %504 = vmatprep.subr.bf16.mxu0 0
    %505 = vmatpush1.bf16.msra.mxu0 0
    %506 = vmatprep.subr.bf16.mxu0 0
    %507 = vmatpush1.bf16.msra.mxu0 0
    %508 = vmatprep.subr.bf16.mxu0 0
    %509 = vmatpush1.bf16.msra.mxu0 0
    %510 = vmatprep.subr.bf16.mxu0 0
    %511 = vmatpush1.bf16.msra.mxu0 0
    %512 = vmatprep.subr.bf16.mxu0 0
    %513 = vmatpush1.bf16.msra.mxu0 0
    %514 = vmatprep.mubr.bf16.mxu0 0
    %515 = vmatmul.mubr.bf16.gmra.mrb[0].mxu0 %v380
    %v516 = vpop.f32.mrb[0].mxu0
    %v517 = vadd.f32 %v88, %v516
    %v518 = vpop.f32.mrb[0].mxu0
    %v519 = vadd.f32 %v88, %v518
    %v520 = vpop.f32.mrb[0].mxu0
    %v521 = vpop.f32.mrb[0].mxu0
    %522 = vdwg.mxu0
    %523 = vmatprep.subr.bf16.mxu0 %v285
    %524 = vmatpush1.bf16.msra.mxu0 %v284
    %525 = vmatprep.subr.bf16.mxu0 %v396
    %526 = vmatpush1.bf16.msra.mxu0 %v393
    %527 = vmatprep.subr.bf16.mxu0 0
    %528 = vmatpush1.bf16.msra.mxu0 0
    %529 = vmatprep.subr.bf16.mxu0 0
    %530 = vmatpush1.bf16.msra.mxu0 0
    %531 = vmatprep.subr.bf16.mxu0 0
    %532 = vmatpush1.bf16.msra.mxu0 0
    %533 = vmatprep.subr.bf16.mxu0 0
    %534 = vmatpush1.bf16.msra.mxu0 0
    %535 = vmatprep.subr.bf16.mxu0 0
    %536 = vmatpush1.bf16.msra.mxu0 0
    %537 = vmatprep.subr.bf16.mxu0 0
    %538 = vmatpush1.bf16.msra.mxu0 0
    %539 = vmatprep.subr.bf16.mxu0 0
    %540 = vmatpush1.bf16.msra.mxu0 0
    %541 = vmatprep.subr.bf16.mxu0 0
    %542 = vmatpush1.bf16.msra.mxu0 0
    %543 = vmatprep.subr.bf16.mxu0 0
    %544 = vmatpush1.bf16.msra.mxu0 0
    %545 = vmatprep.subr.bf16.mxu0 0
    %546 = vmatpush1.bf16.msra.mxu0 0
    %547 = vmatprep.subr.bf16.mxu0 0
    %548 = vmatpush1.bf16.msra.mxu0 0
    %549 = vmatprep.subr.bf16.mxu0 0
    %550 = vmatpush1.bf16.msra.mxu0 0
    %551 = vmatprep.subr.bf16.mxu0 0
    %552 = vmatpush1.bf16.msra.mxu0 0
    %553 = vmatprep.subr.bf16.mxu0 0
    %554 = vmatpush1.bf16.msra.mxu0 0
    %555 = vmatprep.mubr.bf16.mxu0 0
    %556 = vmatmul.mubr.bf16.gmra.mrb[0].mxu0 %v380
    %v557 = vpop.f32.mrb[0].mxu0
    %v558 = vadd.f32 %v88, %v557
    %v559 = vpop.f32.mrb[0].mxu0
    %v560 = vadd.f32 %v88, %v559
    %v561 = vpop.f32.mrb[0].mxu0
    %v562 = vpop.f32.mrb[0].mxu0
    %563 = vdwg.mxu0
    %564 = vmatprep.subr.bf16.mxu0 %v287
    %565 = vmatpush1.bf16.msra.mxu0 %v286
    %566 = vmatprep.subr.bf16.mxu0 %v402
    %567 = vmatpush1.bf16.msra.mxu0 %v399
    %568 = vmatprep.subr.bf16.mxu0 0
    %569 = vmatpush1.bf16.msra.mxu0 0
    %570 = vmatprep.subr.bf16.mxu0 0
    %571 = vmatpush1.bf16.msra.mxu0 0
    %572 = vmatprep.subr.bf16.mxu0 0
    %573 = vmatpush1.bf16.msra.mxu0 0
    %574 = vmatprep.subr.bf16.mxu0 0
    %575 = vmatpush1.bf16.msra.mxu0 0
    %576 = vmatprep.subr.bf16.mxu0 0
    %577 = vmatpush1.bf16.msra.mxu0 0
    %578 = vmatprep.subr.bf16.mxu0 0
    %579 = vmatpush1.bf16.msra.mxu0 0
    %580 = vmatprep.subr.bf16.mxu0 0
    %581 = vmatpush1.bf16.msra.mxu0 0
    %582 = vmatprep.subr.bf16.mxu0 0
    %583 = vmatpush1.bf16.msra.mxu0 0
    %584 = vmatprep.subr.bf16.mxu0 0
    %585 = vmatpush1.bf16.msra.mxu0 0
    %586 = vmatprep.subr.bf16.mxu0 0
    %587 = vmatpush1.bf16.msra.mxu0 0
    %588 = vmatprep.subr.bf16.mxu0 0
    %589 = vmatpush1.bf16.msra.mxu0 0
    %590 = vmatprep.subr.bf16.mxu0 0
    %591 = vmatpush1.bf16.msra.mxu0 0
    %592 = vmatprep.subr.bf16.mxu0 0
    %593 = vmatpush1.bf16.msra.mxu0 0
    %594 = vmatprep.subr.bf16.mxu0 0
    %595 = vmatpush1.bf16.msra.mxu0 0
    %596 = vmatprep.mubr.bf16.mxu0 0
    %597 = vmatmul.mubr.bf16.gmra.mrb[0].mxu0 %v380
    %v598 = vpop.f32.mrb[0].mxu0
    %v599 = vadd.f32 %v88, %v598
    %v600 = vpop.f32.mrb[0].mxu0
    %v601 = vadd.f32 %v88, %v600
    %v602 = vpop.f32.mrb[0].mxu0
    %v603 = vpop.f32.mrb[0].mxu0
    %604 = vdwg.mxu0
    %605 = vmatprep.subr.bf16.mxu0 %v289
    %606 = vmatpush1.bf16.msra.mxu0 %v288
    %607 = vmatprep.subr.bf16.mxu0 %v408
    %608 = vmatpush1.bf16.msra.mxu0 %v405
    %609 = vmatprep.subr.bf16.mxu0 0
    %610 = vmatpush1.bf16.msra.mxu0 0
    %611 = vmatprep.subr.bf16.mxu0 0
    %612 = vmatpush1.bf16.msra.mxu0 0
    %613 = vmatprep.subr.bf16.mxu0 0
    %614 = vmatpush1.bf16.msra.mxu0 0
    %615 = vmatprep.subr.bf16.mxu0 0
    %616 = vmatpush1.bf16.msra.mxu0 0
    %617 = vmatprep.subr.bf16.mxu0 0
    %618 = vmatpush1.bf16.msra.mxu0 0
    %619 = vmatprep.subr.bf16.mxu0 0
    %620 = vmatpush1.bf16.msra.mxu0 0
    %621 = vmatprep.subr.bf16.mxu0 0
    %622 = vmatpush1.bf16.msra.mxu0 0
    %623 = vmatprep.subr.bf16.mxu0 0
    %624 = vmatpush1.bf16.msra.mxu0 0
    %625 = vmatprep.subr.bf16.mxu0 0
    %626 = vmatpush1.bf16.msra.mxu0 0
    %627 = vmatprep.subr.bf16.mxu0 0
    %628 = vmatpush1.bf16.msra.mxu0 0
    %629 = vmatprep.subr.bf16.mxu0 0
    %630 = vmatpush1.bf16.msra.mxu0 0
    %631 = vmatprep.subr.bf16.mxu0 0
    %632 = vmatpush1.bf16.msra.mxu0 0
    %633 = vmatprep.subr.bf16.mxu0 0
    %634 = vmatpush1.bf16.msra.mxu0 0
    %635 = vmatprep.subr.bf16.mxu0 0
    %636 = vmatpush1.bf16.msra.mxu0 0
    %637 = vmatprep.mubr.bf16.mxu0 0
    %638 = vmatmul.mubr.bf16.gmra.mrb[0].mxu0 %v380
    %v639 = vpop.f32.mrb[0].mxu0
    %v640 = vadd.f32 %v88, %v639
    %v641 = vpop.f32.mrb[0].mxu0
    %v642 = vadd.f32 %v88, %v641
    %v643 = vpop.f32.mrb[0].mxu0
    %v644 = vpop.f32.mrb[0].mxu0
    %645 = vdwg.mxu0
    %646 = vmatprep.subr.bf16.mxu0 %v291
    %647 = vmatpush1.bf16.msra.mxu0 %v290
    %648 = vmatprep.subr.bf16.mxu0 %v414
    %649 = vmatpush1.bf16.msra.mxu0 %v411
    %650 = vmatprep.subr.bf16.mxu0 0
    %651 = vmatpush1.bf16.msra.mxu0 0
    %652 = vmatprep.subr.bf16.mxu0 0
    %653 = vmatpush1.bf16.msra.mxu0 0
    %654 = vmatprep.subr.bf16.mxu0 0
    %655 = vmatpush1.bf16.msra.mxu0 0
    %656 = vmatprep.subr.bf16.mxu0 0
    %657 = vmatpush1.bf16.msra.mxu0 0
    %658 = vmatprep.subr.bf16.mxu0 0
    %659 = vmatpush1.bf16.msra.mxu0 0
    %660 = vmatprep.subr.bf16.mxu0 0
    %661 = vmatpush1.bf16.msra.mxu0 0
    %662 = vmatprep.subr.bf16.mxu0 0
    %663 = vmatpush1.bf16.msra.mxu0 0
    %664 = vmatprep.subr.bf16.mxu0 0
    %665 = vmatpush1.bf16.msra.mxu0 0
    %666 = vmatprep.subr.bf16.mxu0 0
    %667 = vmatpush1.bf16.msra.mxu0 0
    %668 = vmatprep.subr.bf16.mxu0 0
    %669 = vmatpush1.bf16.msra.mxu0 0
    %670 = vmatprep.subr.bf16.mxu0 0
    %671 = vmatpush1.bf16.msra.mxu0 0
    %672 = vmatprep.subr.bf16.mxu0 0
    %673 = vmatpush1.bf16.msra.mxu0 0
    %674 = vmatprep.subr.bf16.mxu0 0
    %675 = vmatpush1.bf16.msra.mxu0 0
    %676 = vmatprep.subr.bf16.mxu0 0
    %677 = vmatpush1.bf16.msra.mxu0 0
    %678 = vmatprep.mubr.bf16.mxu0 0
    %679 = vmatmul.mubr.bf16.gmra.mrb[0].mxu0 %v380
    %v680 = vpop.f32.mrb[0].mxu0
    %v681 = vadd.f32 %v88, %v680
    %v682 = vpop.f32.mrb[0].mxu0
    %v683 = vadd.f32 %v88, %v682
    %v684 = vpop.f32.mrb[0].mxu0
    %v685 = vpop.f32.mrb[0].mxu0
    %686 = vdwg.mxu0
    %687 = vmatprep.subr.bf16.mxu0 %v293
    %688 = vmatpush1.bf16.msra.mxu0 %v292
    %689 = vmatprep.subr.bf16.mxu0 %v420
    %690 = vmatpush1.bf16.msra.mxu0 %v417
    %691 = vmatprep.subr.bf16.mxu0 0
    %692 = vmatpush1.bf16.msra.mxu0 0
    %693 = vmatprep.subr.bf16.mxu0 0
    %694 = vmatpush1.bf16.msra.mxu0 0
    %695 = vmatprep.subr.bf16.mxu0 0
    %696 = vmatpush1.bf16.msra.mxu0 0
    %697 = vmatprep.subr.bf16.mxu0 0
    %698 = vmatpush1.bf16.msra.mxu0 0
    %699 = vmatprep.subr.bf16.mxu0 0
    %700 = vmatpush1.bf16.msra.mxu0 0
    %701 = vmatprep.subr.bf16.mxu0 0
    %702 = vmatpush1.bf16.msra.mxu0 0
    %703 = vmatprep.subr.bf16.mxu0 0
    %704 = vmatpush1.bf16.msra.mxu0 0
    %705 = vmatprep.subr.bf16.mxu0 0
    %706 = vmatpush1.bf16.msra.mxu0 0
    %707 = vmatprep.subr.bf16.mxu0 0
    %708 = vmatpush1.bf16.msra.mxu0 0
    %709 = vmatprep.subr.bf16.mxu0 0
    %710 = vmatpush1.bf16.msra.mxu0 0
    %711 = vmatprep.subr.bf16.mxu0 0
    %712 = vmatpush1.bf16.msra.mxu0 0
    %713 = vmatprep.subr.bf16.mxu0 0
    %714 = vmatpush1.bf16.msra.mxu0 0
    %715 = vmatprep.subr.bf16.mxu0 0
    %716 = vmatpush1.bf16.msra.mxu0 0
    %717 = vmatprep.subr.bf16.mxu0 0
    %718 = vmatpush1.bf16.msra.mxu0 0
    %719 = vmatprep.mubr.bf16.mxu0 0
    %720 = vmatmul.mubr.bf16.gmra.mrb[0].mxu0 %v380
    %v721 = vpop.f32.mrb[0].mxu0
    %v722 = vadd.f32 %v88, %v721
    %v723 = vpop.f32.mrb[0].mxu0
    %v724 = vadd.f32 %v88, %v723
    %v725 = vpop.f32.mrb[0].mxu0
    %v726 = vpop.f32.mrb[0].mxu0
    %727 = vdwg.mxu0
    %728 = vmatprep.subr.bf16.mxu0 %v295
    %729 = vmatpush1.bf16.msra.mxu0 %v294
    %730 = vmatprep.subr.bf16.mxu0 %v426
    %731 = vmatpush1.bf16.msra.mxu0 %v423
    %732 = vmatprep.subr.bf16.mxu0 0
    %733 = vmatpush1.bf16.msra.mxu0 0
    %734 = vmatprep.subr.bf16.mxu0 0
    %735 = vmatpush1.bf16.msra.mxu0 0
    %736 = vmatprep.subr.bf16.mxu0 0
    %737 = vmatpush1.bf16.msra.mxu0 0
    %738 = vmatprep.subr.bf16.mxu0 0
    %739 = vmatpush1.bf16.msra.mxu0 0
    %740 = vmatprep.subr.bf16.mxu0 0
    %741 = vmatpush1.bf16.msra.mxu0 0
    %742 = vmatprep.subr.bf16.mxu0 0
    %743 = vmatpush1.bf16.msra.mxu0 0
    %744 = vmatprep.subr.bf16.mxu0 0
    %745 = vmatpush1.bf16.msra.mxu0 0
    %746 = vmatprep.subr.bf16.mxu0 0
    %747 = vmatpush1.bf16.msra.mxu0 0
    %748 = vmatprep.subr.bf16.mxu0 0
    %749 = vmatpush1.bf16.msra.mxu0 0
    %750 = vmatprep.subr.bf16.mxu0 0
    %751 = vmatpush1.bf16.msra.mxu0 0
    %752 = vmatprep.subr.bf16.mxu0 0
    %753 = vmatpush1.bf16.msra.mxu0 0
    %754 = vmatprep.subr.bf16.mxu0 0
    %755 = vmatpush1.bf16.msra.mxu0 0
    %756 = vmatprep.subr.bf16.mxu0 0
    %757 = vmatpush1.bf16.msra.mxu0 0
    %758 = vmatprep.subr.bf16.mxu0 0
    %759 = vmatpush1.bf16.msra.mxu0 0
    %760 = vmatprep.mubr.bf16.mxu0 0
    %761 = vmatmul.mubr.bf16.gmra.mrb[0].mxu0 %v380
    %v762 = vpop.f32.mrb[0].mxu0
    %v763 = vadd.f32 %v88, %v762
    %v764 = vpop.f32.mrb[0].mxu0
    %v765 = vadd.f32 %v88, %v764
    %v766 = vpop.f32.mrb[0].mxu0
    %v767 = vpop.f32.mrb[0].mxu0
    %768 = vdwg.mxu0
    %769 = vmatprep.subr.bf16.mxu0 %v297
    %770 = vmatpush1.bf16.msra.mxu0 %v296
    %771 = vmatprep.subr.bf16.mxu0 %v432
    %772 = vmatpush1.bf16.msra.mxu0 %v429
    %773 = vmatprep.subr.bf16.mxu0 0
    %774 = vmatpush1.bf16.msra.mxu0 0
    %775 = vmatprep.subr.bf16.mxu0 0
    %776 = vmatpush1.bf16.msra.mxu0 0
    %777 = vmatprep.subr.bf16.mxu0 0
    %778 = vmatpush1.bf16.msra.mxu0 0
    %779 = vmatprep.subr.bf16.mxu0 0
    %780 = vmatpush1.bf16.msra.mxu0 0
    %781 = vmatprep.subr.bf16.mxu0 0
    %782 = vmatpush1.bf16.msra.mxu0 0
    %783 = vmatprep.subr.bf16.mxu0 0
    %784 = vmatpush1.bf16.msra.mxu0 0
    %785 = vmatprep.subr.bf16.mxu0 0
    %786 = vmatpush1.bf16.msra.mxu0 0
    %787 = vmatprep.subr.bf16.mxu0 0
    %788 = vmatpush1.bf16.msra.mxu0 0
    %789 = vmatprep.subr.bf16.mxu0 0
    %790 = vmatpush1.bf16.msra.mxu0 0
    %791 = vmatprep.subr.bf16.mxu0 0
    %792 = vmatpush1.bf16.msra.mxu0 0
    %793 = vmatprep.subr.bf16.mxu0 0
    %794 = vmatpush1.bf16.msra.mxu0 0
    %795 = vmatprep.subr.bf16.mxu0 0
    %796 = vmatpush1.bf16.msra.mxu0 0
    %797 = vmatprep.subr.bf16.mxu0 0
    %798 = vmatpush1.bf16.msra.mxu0 0
    %799 = vmatprep.subr.bf16.mxu0 0
    %800 = vmatpush1.bf16.msra.mxu0 0
    %801 = vmatprep.mubr.bf16.mxu0 0
    %802 = vmatmul.mubr.bf16.gmra.mrb[0].mxu0 %v380
    %v803 = vpop.f32.mrb[0].mxu0
    %v804 = vadd.f32 %v88, %v803
    %v805 = vpop.f32.mrb[0].mxu0
    %v806 = vadd.f32 %v88, %v805
    %v807 = vpop.f32.mrb[0].mxu0
    %v808 = vpop.f32.mrb[0].mxu0
    %809 = vdwg.mxu0
    %810 = vmatprep.subr.bf16.mxu0 %v299
    %811 = vmatpush1.bf16.msra.mxu0 %v298
    %812 = vmatprep.subr.bf16.mxu0 %v438
    %813 = vmatpush1.bf16.msra.mxu0 %v435
    %814 = vmatprep.subr.bf16.mxu0 0
    %815 = vmatpush1.bf16.msra.mxu0 0
    %816 = vmatprep.subr.bf16.mxu0 0
    %817 = vmatpush1.bf16.msra.mxu0 0
    %818 = vmatprep.subr.bf16.mxu0 0
    %819 = vmatpush1.bf16.msra.mxu0 0
    %820 = vmatprep.subr.bf16.mxu0 0
    %821 = vmatpush1.bf16.msra.mxu0 0
    %822 = vmatprep.subr.bf16.mxu0 0
    %823 = vmatpush1.bf16.msra.mxu0 0
    %824 = vmatprep.subr.bf16.mxu0 0
    %825 = vmatpush1.bf16.msra.mxu0 0
    %826 = vmatprep.subr.bf16.mxu0 0
    %827 = vmatpush1.bf16.msra.mxu0 0
    %828 = vmatprep.subr.bf16.mxu0 0
    %829 = vmatpush1.bf16.msra.mxu0 0
    %830 = vmatprep.subr.bf16.mxu0 0
    %831 = vmatpush1.bf16.msra.mxu0 0
    %832 = vmatprep.subr.bf16.mxu0 0
    %833 = vmatpush1.bf16.msra.mxu0 0
    %834 = vmatprep.subr.bf16.mxu0 0
    %835 = vmatpush1.bf16.msra.mxu0 0
    %836 = vmatprep.subr.bf16.mxu0 0
    %837 = vmatpush1.bf16.msra.mxu0 0
    %838 = vmatprep.subr.bf16.mxu0 0
    %839 = vmatpush1.bf16.msra.mxu0 0
    %840 = vmatprep.subr.bf16.mxu0 0
    %841 = vmatpush1.bf16.msra.mxu0 0
    %842 = vmatprep.mubr.bf16.mxu0 0
    %843 = vmatmul.mubr.bf16.gmra.mrb[0].mxu0 %v380
    %v844 = vpop.f32.mrb[0].mxu0
    %v845 = vadd.f32 %v88, %v844
    %v846 = vpop.f32.mrb[0].mxu0
    %v847 = vadd.f32 %v88, %v846
    %v848 = vpop.f32.mrb[0].mxu0
    %v849 = vpop.f32.mrb[0].mxu0
    %850 = vdwg.mxu0
    %851 = vmatprep.subr.bf16.mxu0 %v301
    %852 = vmatpush1.bf16.msra.mxu0 %v300
    %853 = vmatprep.subr.bf16.mxu0 %v444
    %854 = vmatpush1.bf16.msra.mxu0 %v441
    %855 = vmatprep.subr.bf16.mxu0 0
    %856 = vmatpush1.bf16.msra.mxu0 0
    %857 = vmatprep.subr.bf16.mxu0 0
    %858 = vmatpush1.bf16.msra.mxu0 0
    %859 = vmatprep.subr.bf16.mxu0 0
    %860 = vmatpush1.bf16.msra.mxu0 0
    %861 = vmatprep.subr.bf16.mxu0 0
    %862 = vmatpush1.bf16.msra.mxu0 0
    %863 = vmatprep.subr.bf16.mxu0 0
    %864 = vmatpush1.bf16.msra.mxu0 0
    %865 = vmatprep.subr.bf16.mxu0 0
    %866 = vmatpush1.bf16.msra.mxu0 0
    %867 = vmatprep.subr.bf16.mxu0 0
    %868 = vmatpush1.bf16.msra.mxu0 0
    %869 = vmatprep.subr.bf16.mxu0 0
    %870 = vmatpush1.bf16.msra.mxu0 0
    %871 = vmatprep.subr.bf16.mxu0 0
    %872 = vmatpush1.bf16.msra.mxu0 0
    %873 = vmatprep.subr.bf16.mxu0 0
    %874 = vmatpush1.bf16.msra.mxu0 0
    %875 = vmatprep.subr.bf16.mxu0 0
    %876 = vmatpush1.bf16.msra.mxu0 0
    %877 = vmatprep.subr.bf16.mxu0 0
    %878 = vmatpush1.bf16.msra.mxu0 0
    %879 = vmatprep.subr.bf16.mxu0 0
    %880 = vmatpush1.bf16.msra.mxu0 0
    %881 = vmatprep.subr.bf16.mxu0 0
    %882 = vmatpush1.bf16.msra.mxu0 0
    %883 = vmatprep.mubr.bf16.mxu0 0
    %884 = vmatmul.mubr.bf16.gmra.mrb[0].mxu0 %v380
    %v885 = vpop.f32.mrb[0].mxu0
    %v886 = vadd.f32 %v88, %v885
    %v887 = vpop.f32.mrb[0].mxu0
    %v888 = vadd.f32 %v88, %v887
    %v889 = vpop.f32.mrb[0].mxu0
    %v890 = vpop.f32.mrb[0].mxu0
    %891 = vdwg.mxu0
    %892 = vmatprep.subr.bf16.mxu0 %v303
    %893 = vmatpush1.bf16.msra.mxu0 %v302
    %894 = vmatprep.subr.bf16.mxu0 %v450
    %895 = vmatpush1.bf16.msra.mxu0 %v447
    %896 = vmatprep.subr.bf16.mxu0 0
    %897 = vmatpush1.bf16.msra.mxu0 0
    %898 = vmatprep.subr.bf16.mxu0 0
    %899 = vmatpush1.bf16.msra.mxu0 0
    %900 = vmatprep.subr.bf16.mxu0 0
    %901 = vmatpush1.bf16.msra.mxu0 0
    %902 = vmatprep.subr.bf16.mxu0 0
    %903 = vmatpush1.bf16.msra.mxu0 0
    %904 = vmatprep.subr.bf16.mxu0 0
    %905 = vmatpush1.bf16.msra.mxu0 0
    %906 = vmatprep.subr.bf16.mxu0 0
    %907 = vmatpush1.bf16.msra.mxu0 0
    %908 = vmatprep.subr.bf16.mxu0 0
    %909 = vmatpush1.bf16.msra.mxu0 0
    %910 = vmatprep.subr.bf16.mxu0 0
    %911 = vmatpush1.bf16.msra.mxu0 0
    %912 = vmatprep.subr.bf16.mxu0 0
    %913 = vmatpush1.bf16.msra.mxu0 0
    %914 = vmatprep.subr.bf16.mxu0 0
    %915 = vmatpush1.bf16.msra.mxu0 0
    %916 = vmatprep.subr.bf16.mxu0 0
    %917 = vmatpush1.bf16.msra.mxu0 0
    %918 = vmatprep.subr.bf16.mxu0 0
    %919 = vmatpush1.bf16.msra.mxu0 0
    %920 = vmatprep.subr.bf16.mxu0 0
    %921 = vmatpush1.bf16.msra.mxu0 0
    %922 = vmatprep.subr.bf16.mxu0 0
    %923 = vmatpush1.bf16.msra.mxu0 0
    %924 = vmatprep.mubr.bf16.mxu0 0
    %925 = vmatmul.mubr.bf16.gmra.mrb[0].mxu0 %v380
    %v926 = vpop.f32.mrb[0].mxu0
    %v927 = vadd.f32 %v88, %v926
    %v928 = vpop.f32.mrb[0].mxu0
    %v929 = vadd.f32 %v88, %v928
    %v930 = vpop.f32.mrb[0].mxu0
    %v931 = vpop.f32.mrb[0].mxu0
    %932 = vdwg.mxu0
    %933 = vmatprep.subr.bf16.mxu0 %v305
    %934 = vmatpush1.bf16.msra.mxu0 %v304
    %935 = vmatprep.subr.bf16.mxu0 %v456
    %936 = vmatpush1.bf16.msra.mxu0 %v453
    %937 = vmatprep.subr.bf16.mxu0 0
    %938 = vmatpush1.bf16.msra.mxu0 0
    %939 = vmatprep.subr.bf16.mxu0 0
    %940 = vmatpush1.bf16.msra.mxu0 0
    %941 = vmatprep.subr.bf16.mxu0 0
    %942 = vmatpush1.bf16.msra.mxu0 0
    %943 = vmatprep.subr.bf16.mxu0 0
    %944 = vmatpush1.bf16.msra.mxu0 0
    %945 = vmatprep.subr.bf16.mxu0 0
    %946 = vmatpush1.bf16.msra.mxu0 0
    %947 = vmatprep.subr.bf16.mxu0 0
    %948 = vmatpush1.bf16.msra.mxu0 0
    %949 = vmatprep.subr.bf16.mxu0 0
    %950 = vmatpush1.bf16.msra.mxu0 0
    %951 = vmatprep.subr.bf16.mxu0 0
    %952 = vmatpush1.bf16.msra.mxu0 0
    %953 = vmatprep.subr.bf16.mxu0 0
    %954 = vmatpush1.bf16.msra.mxu0 0
    %955 = vmatprep.subr.bf16.mxu0 0
    %956 = vmatpush1.bf16.msra.mxu0 0
    %957 = vmatprep.subr.bf16.mxu0 0
    %958 = vmatpush1.bf16.msra.mxu0 0
    %959 = vmatprep.subr.bf16.mxu0 0
    %960 = vmatpush1.bf16.msra.mxu0 0
    %961 = vmatprep.subr.bf16.mxu0 0
    %962 = vmatpush1.bf16.msra.mxu0 0
    %963 = vmatprep.subr.bf16.mxu0 0
    %964 = vmatpush1.bf16.msra.mxu0 0
    %965 = vmatprep.mubr.bf16.mxu0 0
    %966 = vmatmul.mubr.bf16.gmra.mrb[0].mxu0 %v380
    %v967 = vpop.f32.mrb[0].mxu0
    %v968 = vadd.f32 %v88, %v967
    %v969 = vpop.f32.mrb[0].mxu0
    %v970 = vadd.f32 %v88, %v969
    %v971 = vpop.f32.mrb[0].mxu0
    %v972 = vpop.f32.mrb[0].mxu0
    %973 = vdwg.mxu0
    %974 = vmatprep.subr.bf16.mxu0 %v307
    %975 = vmatpush1.bf16.msra.mxu0 %v306
    %976 = vmatprep.subr.bf16.mxu0 %v462
    %977 = vmatpush1.bf16.msra.mxu0 %v459
    %978 = vmatprep.subr.bf16.mxu0 0
    %979 = vmatpush1.bf16.msra.mxu0 0
    %980 = vmatprep.subr.bf16.mxu0 0
    %981 = vmatpush1.bf16.msra.mxu0 0
    %982 = vmatprep.subr.bf16.mxu0 0
    %983 = vmatpush1.bf16.msra.mxu0 0
    %984 = vmatprep.subr.bf16.mxu0 0
    %985 = vmatpush1.bf16.msra.mxu0 0
    %986 = vmatprep.subr.bf16.mxu0 0
    %987 = vmatpush1.bf16.msra.mxu0 0
    %988 = vmatprep.subr.bf16.mxu0 0
    %989 = vmatpush1.bf16.msra.mxu0 0
    %990 = vmatprep.subr.bf16.mxu0 0
    %991 = vmatpush1.bf16.msra.mxu0 0
    %992 = vmatprep.subr.bf16.mxu0 0
    %993 = vmatpush1.bf16.msra.mxu0 0
    %994 = vmatprep.subr.bf16.mxu0 0
    %995 = vmatpush1.bf16.msra.mxu0 0
    %996 = vmatprep.subr.bf16.mxu0 0
    %997 = vmatpush1.bf16.msra.mxu0 0
    %998 = vmatprep.subr.bf16.mxu0 0
    %999 = vmatpush1.bf16.msra.mxu0 0
    %1000 = vmatprep.subr.bf16.mxu0 0
    %1001 = vmatpush1.bf16.msra.mxu0 0
    %1002 = vmatprep.subr.bf16.mxu0 0
    %1003 = vmatpush1.bf16.msra.mxu0 0
    %1004 = vmatprep.subr.bf16.mxu0 0
    %1005 = vmatpush1.bf16.msra.mxu0 0
    %1006 = vmatprep.mubr.bf16.mxu0 0
    %1007 = vmatmul.mubr.bf16.gmra.mrb[0].mxu0 %v380
    %v1008 = vpop.f32.mrb[0].mxu0
    %v1009 = vadd.f32 %v88, %v1008
    %v1010 = vpop.f32.mrb[0].mxu0
    %v1011 = vadd.f32 %v88, %v1010
    %v1012 = vpop.f32.mrb[0].mxu0
    %v1013 = vpop.f32.mrb[0].mxu0
    %1014 = vdwg.mxu0
    %1015 = vmatprep.subr.bf16.mxu0 %v309
    %1016 = vmatpush1.bf16.msra.mxu0 %v308
    %1017 = vmatprep.subr.bf16.mxu0 %v468
    %1018 = vmatpush1.bf16.msra.mxu0 %v465
    %1019 = vmatprep.subr.bf16.mxu0 0
    %1020 = vmatpush1.bf16.msra.mxu0 0
    %1021 = vmatprep.subr.bf16.mxu0 0
    %1022 = vmatpush1.bf16.msra.mxu0 0
    %1023 = vmatprep.subr.bf16.mxu0 0
    %1024 = vmatpush1.bf16.msra.mxu0 0
    %1025 = vmatprep.subr.bf16.mxu0 0
    %1026 = vmatpush1.bf16.msra.mxu0 0
    %1027 = vmatprep.subr.bf16.mxu0 0
    %1028 = vmatpush1.bf16.msra.mxu0 0
    %1029 = vmatprep.subr.bf16.mxu0 0
    %1030 = vmatpush1.bf16.msra.mxu0 0
    %1031 = vmatprep.subr.bf16.mxu0 0
    %1032 = vmatpush1.bf16.msra.mxu0 0
    %1033 = vmatprep.subr.bf16.mxu0 0
    %1034 = vmatpush1.bf16.msra.mxu0 0
    %1035 = vmatprep.subr.bf16.mxu0 0
    %1036 = vmatpush1.bf16.msra.mxu0 0
    %1037 = vmatprep.subr.bf16.mxu0 0
    %1038 = vmatpush1.bf16.msra.mxu0 0
    %1039 = vmatprep.subr.bf16.mxu0 0
    %1040 = vmatpush1.bf16.msra.mxu0 0
    %1041 = vmatprep.subr.bf16.mxu0 0
    %1042 = vmatpush1.bf16.msra.mxu0 0
    %1043 = vmatprep.subr.bf16.mxu0 0
    %1044 = vmatpush1.bf16.msra.mxu0 0
    %1045 = vmatprep.subr.bf16.mxu0 0
    %1046 = vmatpush1.bf16.msra.mxu0 0
    %1047 = vmatprep.mubr.bf16.mxu0 0
    %1048 = vmatmul.mubr.bf16.gmra.mrb[0].mxu0 %v380
    %v1049 = vpop.f32.mrb[0].mxu0
    %v1050 = vadd.f32 %v88, %v1049
    %v1051 = vpop.f32.mrb[0].mxu0
    %v1052 = vadd.f32 %v88, %v1051
    %v1053 = vpop.f32.mrb[0].mxu0
    %v1054 = vpop.f32.mrb[0].mxu0
    %1055 = vdwg.mxu0
    %1056 = vmatprep.subr.bf16.mxu0 %v311
    %1057 = vmatpush1.bf16.msra.mxu0 %v310
    %1058 = vmatprep.subr.bf16.mxu0 %v474
    %1059 = vmatpush1.bf16.msra.mxu0 %v471
    %1060 = vmatprep.subr.bf16.mxu0 0
    %1061 = vmatpush1.bf16.msra.mxu0 0
    %1062 = vmatprep.subr.bf16.mxu0 0
    %1063 = vmatpush1.bf16.msra.mxu0 0
    %1064 = vmatprep.subr.bf16.mxu0 0
    %1065 = vmatpush1.bf16.msra.mxu0 0
    %1066 = vmatprep.subr.bf16.mxu0 0
    %1067 = vmatpush1.bf16.msra.mxu0 0
    %1068 = vmatprep.subr.bf16.mxu0 0
    %1069 = vmatpush1.bf16.msra.mxu0 0
    %1070 = vmatprep.subr.bf16.mxu0 0
    %1071 = vmatpush1.bf16.msra.mxu0 0
    %1072 = vmatprep.subr.bf16.mxu0 0
    %1073 = vmatpush1.bf16.msra.mxu0 0
    %1074 = vmatprep.subr.bf16.mxu0 0
    %1075 = vmatpush1.bf16.msra.mxu0 0
    %1076 = vmatprep.subr.bf16.mxu0 0
    %1077 = vmatpush1.bf16.msra.mxu0 0
    %1078 = vmatprep.subr.bf16.mxu0 0
    %1079 = vmatpush1.bf16.msra.mxu0 0
    %1080 = vmatprep.subr.bf16.mxu0 0
    %1081 = vmatpush1.bf16.msra.mxu0 0
    %1082 = vmatprep.subr.bf16.mxu0 0
    %1083 = vmatpush1.bf16.msra.mxu0 0
    %1084 = vmatprep.subr.bf16.mxu0 0
    %1085 = vmatpush1.bf16.msra.mxu0 0
    %1086 = vmatprep.subr.bf16.mxu0 0
    %1087 = vmatpush1.bf16.msra.mxu0 0
    %1088 = vmatprep.mubr.bf16.mxu0 0
    %1089 = vmatmul.mubr.bf16.gmra.mrb[0].mxu0 %v380
    %v1090 = vpop.f32.mrb[0].mxu0
    %v1091 = vadd.f32 %v88, %v1090
    %v1092 = vpop.f32.mrb[0].mxu0
    %v1093 = vadd.f32 %v88, %v1092
    %v1094 = vpop.f32.mrb[0].mxu0
    %v1095 = vpop.f32.mrb[0].mxu0
    %1096 = vdwg.mxu0
    %1097 = vmatprep.subr.bf16.mxu0 %v313
    %1098 = vmatpush1.bf16.msra.mxu0 %v312
    %1099 = vmatprep.subr.bf16.mxu0 %v480
    %1100 = vmatpush1.bf16.msra.mxu0 %v477
    %1101 = vmatprep.subr.bf16.mxu0 0
    %1102 = vmatpush1.bf16.msra.mxu0 0
    %1103 = vmatprep.subr.bf16.mxu0 0
    %1104 = vmatpush1.bf16.msra.mxu0 0
    %1105 = vmatprep.subr.bf16.mxu0 0
    %1106 = vmatpush1.bf16.msra.mxu0 0
    %1107 = vmatprep.subr.bf16.mxu0 0
    %1108 = vmatpush1.bf16.msra.mxu0 0
    %1109 = vmatprep.subr.bf16.mxu0 0
    %1110 = vmatpush1.bf16.msra.mxu0 0
    %1111 = vmatprep.subr.bf16.mxu0 0
    %1112 = vmatpush1.bf16.msra.mxu0 0
    %1113 = vmatprep.subr.bf16.mxu0 0
    %1114 = vmatpush1.bf16.msra.mxu0 0
    %1115 = vmatprep.subr.bf16.mxu0 0
    %1116 = vmatpush1.bf16.msra.mxu0 0
    %1117 = vmatprep.subr.bf16.mxu0 0
    %1118 = vmatpush1.bf16.msra.mxu0 0
    %1119 = vmatprep.subr.bf16.mxu0 0
    %1120 = vmatpush1.bf16.msra.mxu0 0
    %1121 = vmatprep.subr.bf16.mxu0 0
    %1122 = vmatpush1.bf16.msra.mxu0 0
    %1123 = vmatprep.subr.bf16.mxu0 0
    %1124 = vmatpush1.bf16.msra.mxu0 0
    %1125 = vmatprep.subr.bf16.mxu0 0
    %1126 = vmatpush1.bf16.msra.mxu0 0
    %1127 = vmatprep.subr.bf16.mxu0 0
    %1128 = vmatpush1.bf16.msra.mxu0 0
    %1129 = vmatprep.mubr.bf16.mxu0 0
    %1130 = vmatmul.mubr.bf16.gmra.mrb[0].mxu0 %v380
    %v1131 = vpop.f32.mrb[0].mxu0
    %v1132 = vadd.f32 %v88, %v1131
    %v1133 = vpop.f32.mrb[0].mxu0
    %v1134 = vadd.f32 %v88, %v1133
    %v1135 = vpop.f32.mrb[0].mxu0
    %v1136 = vpop.f32.mrb[0].mxu0
    %1137 = vdwg.mxu0
    %v1138 = vmax.f32 %v517, 0.0
    %v1139 = vmax.f32 %v519, 0.0
    %v1140 = vmax.f32 %v558, 0.0
    %v1141 = vmax.f32 %v560, 0.0
    %v1142 = vmax.f32 %v599, 0.0
    %v1143 = vmax.f32 %v601, 0.0
    %v1144 = vmax.f32 %v640, 0.0
    %v1145 = vmax.f32 %v642, 0.0
    %v1146 = vmax.f32 %v681, 0.0
    %v1147 = vmax.f32 %v683, 0.0
    %v1148 = vmax.f32 %v722, 0.0
    %v1149 = vmax.f32 %v724, 0.0
    %v1150 = vmax.f32 %v763, 0.0
    %v1151 = vmax.f32 %v765, 0.0
    %v1152 = vmax.f32 %v804, 0.0
    %v1153 = vmax.f32 %v806, 0.0
    %v1154 = vmax.f32 %v845, 0.0
    %v1155 = vmax.f32 %v847, 0.0
    %v1156 = vmax.f32 %v886, 0.0
    %v1157 = vmax.f32 %v888, 0.0
    %v1158 = vmax.f32 %v927, 0.0
    %v1159 = vmax.f32 %v929, 0.0
    %v1160 = vmax.f32 %v968, 0.0
    %v1161 = vmax.f32 %v970, 0.0
    %v1162 = vmax.f32 %v1009, 0.0
    %v1163 = vmax.f32 %v1011, 0.0
    %v1164 = vmax.f32 %v1050, 0.0
    %v1165 = vmax.f32 %v1052, 0.0
    %v1166 = vmax.f32 %v1091, 0.0
    %v1167 = vmax.f32 %v1093, 0.0
    %v1168 = vmax.f32 %v1132, 0.0
    %v1169 = vmax.f32 %v1134, 0.0
    %v1170 = vlaneseq
    %v1171 = vand.u32 %v1170, 127
    %v1172 = vadd.f32 %v1138, %v1139
    %1173 = vadd.xlane.f32.xlu0 %v1172
    %v1174 = vpop.xlane.xlu0 %1173
    %vm1175 = vcmp.eq.s32.totalorder %v1171, 0
    %v1176 = vsel %vm1175, 1, 0
    %vm1177 = vcmp.eq.s32.totalorder %v1176, 1
    %v1178 = vsel %vm1177, %v1174, 0.0
    %v1179 = vadd.f32 %v1178, 0.0
    %v1180 = vadd.f32 %v1140, %v1141
    %1181 = vadd.xlane.f32.xlu0 %v1180
    %v1182 = vpop.xlane.xlu0 %1181
    %vm1183 = vcmp.eq.s32.totalorder %v1171, 1
    %v1184 = vsel %vm1183, 1, 0
    %vm1185 = vcmp.eq.s32.totalorder %v1184, 1
    %v1186 = vsel %vm1185, %v1182, 0.0
    %v1187 = vadd.f32 %v1179, %v1186
    %v1188 = vadd.f32 %v1142, %v1143
    %1189 = vadd.xlane.f32.xlu0 %v1188
    %v1190 = vpop.xlane.xlu0 %1189
    %vm1191 = vcmp.eq.s32.totalorder %v1171, 2
    %v1192 = vsel %vm1191, 1, 0
    %vm1193 = vcmp.eq.s32.totalorder %v1192, 1
    %v1194 = vsel %vm1193, %v1190, 0.0
    %v1195 = vadd.f32 %v1187, %v1194
    %v1196 = vadd.f32 %v1144, %v1145
    %1197 = vadd.xlane.f32.xlu0 %v1196
    %v1198 = vpop.xlane.xlu0 %1197
    %vm1199 = vcmp.eq.s32.totalorder %v1171, 3
    %v1200 = vsel %vm1199, 1, 0
    %vm1201 = vcmp.eq.s32.totalorder %v1200, 1
    %v1202 = vsel %vm1201, %v1198, 0.0
    %v1203 = vadd.f32 %v1195, %v1202
    %v1204 = vadd.f32 %v1146, %v1147
    %1205 = vadd.xlane.f32.xlu0 %v1204
    %v1206 = vpop.xlane.xlu0 %1205
    %vm1207 = vcmp.eq.s32.totalorder %v1171, 4
    %v1208 = vsel %vm1207, 1, 0
    %vm1209 = vcmp.eq.s32.totalorder %v1208, 1
    %v1210 = vsel %vm1209, %v1206, 0.0
    %v1211 = vadd.f32 %v1203, %v1210
    %v1212 = vadd.f32 %v1148, %v1149
    %1213 = vadd.xlane.f32.xlu0 %v1212
    %v1214 = vpop.xlane.xlu0 %1213
    %vm1215 = vcmp.eq.s32.totalorder %v1171, 5
    %v1216 = vsel %vm1215, 1, 0
    %vm1217 = vcmp.eq.s32.totalorder %v1216, 1
    %v1218 = vsel %vm1217, %v1214, 0.0
    %v1219 = vadd.f32 %v1211, %v1218
    %v1220 = vadd.f32 %v1150, %v1151
    %1221 = vadd.xlane.f32.xlu0 %v1220
    %v1222 = vpop.xlane.xlu0 %1221
    %vm1223 = vcmp.eq.s32.totalorder %v1171, 6
    %v1224 = vsel %vm1223, 1, 0
    %vm1225 = vcmp.eq.s32.totalorder %v1224, 1
    %v1226 = vsel %vm1225, %v1222, 0.0
    %v1227 = vadd.f32 %v1219, %v1226
    %v1228 = vadd.f32 %v1152, %v1153
    %1229 = vadd.xlane.f32.xlu0 %v1228
    %v1230 = vpop.xlane.xlu0 %1229
    %vm1231 = vcmp.eq.s32.totalorder %v1171, 7
    %v1232 = vsel %vm1231, 1, 0
    %vm1233 = vcmp.eq.s32.totalorder %v1232, 1
    %v1234 = vsel %vm1233, %v1230, 0.0
    %v1235 = vadd.f32 %v1227, %v1234
    %v1236 = vadd.f32 %v1154, %v1155
    %1237 = vadd.xlane.f32.xlu0 %v1236
    %v1238 = vpop.xlane.xlu0 %1237
    %vm1239 = vcmp.eq.s32.totalorder %v1171, 8
    %v1240 = vsel %vm1239, 1, 0
    %vm1241 = vcmp.eq.s32.totalorder %v1240, 1
    %v1242 = vsel %vm1241, %v1238, 0.0
    %v1243 = vadd.f32 %v1235, %v1242
    %v1244 = vadd.f32 %v1156, %v1157
    %1245 = vadd.xlane.f32.xlu0 %v1244
    %v1246 = vpop.xlane.xlu0 %1245
    %vm1247 = vcmp.eq.s32.totalorder %v1171, 9
    %v1248 = vsel %vm1247, 1, 0
    %vm1249 = vcmp.eq.s32.totalorder %v1248, 1
    %v1250 = vsel %vm1249, %v1246, 0.0
    %v1251 = vadd.f32 %v1243, %v1250
    %v1252 = vadd.f32 %v1158, %v1159
    %1253 = vadd.xlane.f32.xlu0 %v1252
    %v1254 = vpop.xlane.xlu0 %1253
    %vm1255 = vcmp.eq.s32.totalorder %v1171, 10
    %v1256 = vsel %vm1255, 1, 0
    %vm1257 = vcmp.eq.s32.totalorder %v1256, 1
    %v1258 = vsel %vm1257, %v1254, 0.0
    %v1259 = vadd.f32 %v1251, %v1258
    %v1260 = vadd.f32 %v1160, %v1161
    %1261 = vadd.xlane.f32.xlu0 %v1260
    %v1262 = vpop.xlane.xlu0 %1261
    %vm1263 = vcmp.eq.s32.totalorder %v1171, 11
    %v1264 = vsel %vm1263, 1, 0
    %vm1265 = vcmp.eq.s32.totalorder %v1264, 1
    %v1266 = vsel %vm1265, %v1262, 0.0
    %v1267 = vadd.f32 %v1259, %v1266
    %v1268 = vadd.f32 %v1162, %v1163
    %1269 = vadd.xlane.f32.xlu0 %v1268
    %v1270 = vpop.xlane.xlu0 %1269
    %vm1271 = vcmp.eq.s32.totalorder %v1171, 12
    %v1272 = vsel %vm1271, 1, 0
    %vm1273 = vcmp.eq.s32.totalorder %v1272, 1
    %v1274 = vsel %vm1273, %v1270, 0.0
    %v1275 = vadd.f32 %v1267, %v1274
    %v1276 = vadd.f32 %v1164, %v1165
    %1277 = vadd.xlane.f32.xlu0 %v1276
    %v1278 = vpop.xlane.xlu0 %1277
    %vm1279 = vcmp.eq.s32.totalorder %v1171, 13
    %v1280 = vsel %vm1279, 1, 0
    %vm1281 = vcmp.eq.s32.totalorder %v1280, 1
    %v1282 = vsel %vm1281, %v1278, 0.0
    %v1283 = vadd.f32 %v1275, %v1282
    %v1284 = vadd.f32 %v1166, %v1167
    %1285 = vadd.xlane.f32.xlu0 %v1284
    %v1286 = vpop.xlane.xlu0 %1285
    %vm1287 = vcmp.eq.s32.totalorder %v1171, 14
    %v1288 = vsel %vm1287, 1, 0
    %vm1289 = vcmp.eq.s32.totalorder %v1288, 1
    %v1290 = vsel %vm1289, %v1286, 0.0
    %v1291 = vadd.f32 %v1283, %v1290
    %v1292 = vadd.f32 %v1168, %v1169
    %1293 = vadd.xlane.f32.xlu0 %v1292
    %v1294 = vpop.xlane.xlu0 %1293
    %vm1295 = vcmp.eq.s32.totalorder %v1171, 15
    %v1296 = vsel %vm1295, 1, 0
    %vm1297 = vcmp.eq.s32.totalorder %v1296, 1
    %v1298 = vsel %vm1297, %v1294, 0.0
    %v1299 = vadd.f32 %v1291, %v1298
    %v1300 = vpack.c.bf16 %v1299, %v1299
    %v1301 = vpack.c.bf16 %v14, %v14
    %v1302 = vlaneseq
    %v1303 = vshrl.u32 %v1302, 7
    %v1304 = vsub.s32 0, %v1303
    %v1305 = vrot.slane %v15, %v1304
    %1306 = vxpose.xlu0.c.b16.start [1/8] %v1300, 128
    %1307 = vxpose.xlu0.c.b16.cont [2/8] 0, 128
    %1308 = vxpose.xlu0.c.b16.cont [3/8] 0, 128
    %1309 = vxpose.xlu0.c.b16.cont [4/8] 0, 128
    %1310 = vxpose.xlu0.c.b16.cont [5/8] 0, 128
    %1311 = vxpose.xlu0.c.b16.cont [6/8] 0, 128
    %1312 = vxpose.xlu0.c.b16.cont [7/8] 0, 128
    %1313 = vxpose.xlu0.c.b16.end [8/8] 0, 128
    %v1314 = vpop.trf.xlu0
    %v1315 = vpop.trf.xlu0
    %v1316 = vpop.trf.xlu0
    %v1317 = vpop.trf.xlu0
    %v1318 = vpop.trf.xlu0
    %v1319 = vpop.trf.xlu0
    %v1320 = vpop.trf.xlu0
    %v1321 = vpop.trf.xlu0
    %vm1322 = vcmask 64512
    %v1324 = vsel %vm1322, %v1314, 0
    %vm1326 = vcmask 1043456
    %v1328 = vsel %vm1326, %v1301, 0
    %1330 = vmatprep.subr.bf16.mxu0 0
    %1331 = vmatpush1.bf16.msra.mxu0 %v1328
    %1332 = vmatprep.subr.bf16.mxu0 0
    %1333 = vmatpush1.bf16.msra.mxu0 0
    %1334 = vmatprep.subr.bf16.mxu0 0
    %1335 = vmatpush1.bf16.msra.mxu0 0
    %1336 = vmatprep.subr.bf16.mxu0 0
    %1337 = vmatpush1.bf16.msra.mxu0 0
    %1338 = vmatprep.subr.bf16.mxu0 0
    %1339 = vmatpush1.bf16.msra.mxu0 0
    %1340 = vmatprep.subr.bf16.mxu0 0
    %1341 = vmatpush1.bf16.msra.mxu0 0
    %1342 = vmatprep.subr.bf16.mxu0 0
    %1343 = vmatpush1.bf16.msra.mxu0 0
    %1344 = vmatprep.subr.bf16.mxu0 0
    %1345 = vmatpush1.bf16.msra.mxu0 0
    %1346 = vmatprep.subr.bf16.mxu0 0
    %1347 = vmatpush1.bf16.msra.mxu0 0
    %1348 = vmatprep.subr.bf16.mxu0 0
    %1349 = vmatpush1.bf16.msra.mxu0 0
    %1350 = vmatprep.subr.bf16.mxu0 0
    %1351 = vmatpush1.bf16.msra.mxu0 0
    %1352 = vmatprep.subr.bf16.mxu0 0
    %1353 = vmatpush1.bf16.msra.mxu0 0
    %1354 = vmatprep.subr.bf16.mxu0 0
    %1355 = vmatpush1.bf16.msra.mxu0 0
    %1356 = vmatprep.subr.bf16.mxu0 0
    %1357 = vmatpush1.bf16.msra.mxu0 0
    %1358 = vmatprep.subr.bf16.mxu0 0
    %1359 = vmatpush1.bf16.msra.mxu0 0
    %1360 = vmatprep.subr.bf16.mxu0 0
    %1361 = vmatpush1.bf16.msra.mxu0 0
    %1362 = vmatprep.mubr.bf16.mxu0 0
    %1363 = vmatmul.mubr.bf16.gmra.mrb[0].mxu0 %v1324
    %v1364 = vpop.f32.mrb[0].mxu0
    %v1365 = vadd.f32 %v1305, %v1364
    %v1366 = vpop.f32.mrb[0].mxu0
    %v1367 = vpop.f32.mrb[0].mxu0
    %v1368 = vadd.f32 %v1305, %v1367
    %v1369 = vpop.f32.mrb[0].mxu0
    %1370 = vdwg.mxu0
    %v1371 = vpack.c.bf16 %v1368, %v1365
    %1373 = vrot.lane.b32.xlu0 %v1371, 112
    %v1374 = vpop.permute.xlu0 %1373
    %vm1375 = vcmask 130048
    %v1377 = vsel %vm1375, %v1371, 0
    %v1380 = vsel %vm1375, %v1374, 0
    %1382 = vmatprep.subr.bf16.mxu0 0
    %1383 = vmatpush1.bf16.xpose.msra.mxu0 %v1380
    %1384 = vmatprep.subr.bf16.mxu0 0
    %1385 = vmatpush1.bf16.xpose.msra.mxu0 0
    %1386 = vmatprep.subr.bf16.mxu0 0
    %1387 = vmatpush1.bf16.xpose.msra.mxu0 0
    %1388 = vmatprep.subr.bf16.mxu0 0
    %1389 = vmatpush1.bf16.xpose.msra.mxu0 0
    %1390 = vmatprep.subr.bf16.mxu0 0
    %1391 = vmatpush1.bf16.xpose.msra.mxu0 0
    %1392 = vmatprep.subr.bf16.mxu0 0
    %1393 = vmatpush1.bf16.xpose.msra.mxu0 0
    %1394 = vmatprep.subr.bf16.mxu0 0
    %1395 = vmatpush1.bf16.xpose.msra.mxu0 0
    %1396 = vmatprep.subr.bf16.mxu0 0
    %1397 = vmatpush1.bf16.xpose.msra.mxu0 0
    %1398 = vmatprep.subr.bf16.mxu0 0
    %1399 = vmatpush1.bf16.xpose.msra.mxu0 0
    %1400 = vmatprep.subr.bf16.mxu0 0
    %1401 = vmatpush1.bf16.xpose.msra.mxu0 0
    %1402 = vmatprep.subr.bf16.mxu0 0
    %1403 = vmatpush1.bf16.xpose.msra.mxu0 0
    %1404 = vmatprep.subr.bf16.mxu0 0
    %1405 = vmatpush1.bf16.xpose.msra.mxu0 0
    %1406 = vmatprep.subr.bf16.mxu0 0
    %1407 = vmatpush1.bf16.xpose.msra.mxu0 0
    %1408 = vmatprep.subr.bf16.mxu0 0
    %1409 = vmatpush1.bf16.xpose.msra.mxu0 0
    %1410 = vmatprep.subr.bf16.mxu0 0
    %1411 = vmatpush1.bf16.xpose.msra.mxu0 0
    %1412 = vmatprep.subr.bf16.mxu0 0
    %1413 = vmatpush1.bf16.xpose.msra.mxu0 0
    %1414 = vmatprep.mubr.bf16.mxu0 0
    %1415 = vmatmul.mubr.bf16.gmra.mrb[0].mxu0 %v1377
    %v1416 = vpop.f32.mrb[0].mxu0
    %v1417 = vadd.f32 0.0, %v1416
    %v1418 = vpop.f32.mrb[0].mxu0
    %v1419 = vpop.f32.mrb[0].mxu0
    %v1420 = vadd.f32 0.0, %v1419
    %v1421 = vpop.f32.mrb[0].mxu0
    %1422 = vdwg.mxu0
    %v1423 = vmul.f32 %v1417, 0.25
    %v1424 = vmul.f32 %v1420, 0.25
    %v1425 = vadd.f32 %v1423, %v18
    %v1426 = vadd.f32 %v1424, %v19
    %v1427 = vsel %vm1375, %v1425, -inf
    %1428 = vmax.xlane.f32.xlu0 %v1427
    %v1429 = vpop.xlane.xlu0 %1428
    %v1430 = vsel %vm1375, %v1426, -inf
    %1431 = vmax.xlane.f32.xlu0 %v1430
    %v1432 = vpop.xlane.xlu0 %1431
    %v1433 = vsub.f32 %v1425, %v1429
    %v1434 = vsub.f32 %v1426, %v1432
    %v1435 = vmul.f32 %v1433, 1.442695
    %v1436 = vpow.pop %v1435
    %v1437 = vmul.f32 %v1434, 1.442695
    %v1438 = vpow.pop %v1437
    %v1439 = vsel %vm1375, %v1436, 0.0
    %1440 = vadd.xlane.f32.xlu0 %v1439
    %v1441 = vpop.xlane.xlu0 %1440
    %v1442 = vsel %vm1375, %v1438, 0.0
    %1443 = vadd.xlane.f32.xlu0 %v1442
    %v1444 = vpop.xlane.xlu0 %1443
    %v1445 = vrcp.pop %v1441
    %v1446 = vrcp.pop %v1444
    %v1447 = vmul.f32 %v1436, %v1445
    %v1448 = vmul.f32 %v1438, %v1446
    %v1449 = vpack.c.bf16 %v1448, %v1447
    %1450 = vrot.lane.b32.xlu0 %v1371, 96
    %v1451 = vpop.permute.xlu0 %1450
    %v1454 = vsel %vm1375, %v1449, 0
    %1456 = vmatprep.subr.bf16.mxu0 0
    %1457 = vmatpush1.bf16.msra.mxu0 %v1451
    %1458 = vmatprep.subr.bf16.mxu0 0
    %1459 = vmatpush1.bf16.msra.mxu0 0
    %1460 = vmatprep.subr.bf16.mxu0 0
    %1461 = vmatpush1.bf16.msra.mxu0 0
    %1462 = vmatprep.subr.bf16.mxu0 0
    %1463 = vmatpush1.bf16.msra.mxu0 0
    %1464 = vmatprep.subr.bf16.mxu0 0
    %1465 = vmatpush1.bf16.msra.mxu0 0
    %1466 = vmatprep.subr.bf16.mxu0 0
    %1467 = vmatpush1.bf16.msra.mxu0 0
    %1468 = vmatprep.subr.bf16.mxu0 0
    %1469 = vmatpush1.bf16.msra.mxu0 0
    %1470 = vmatprep.subr.bf16.mxu0 0
    %1471 = vmatpush1.bf16.msra.mxu0 0
    %1472 = vmatprep.subr.bf16.mxu0 0
    %1473 = vmatpush1.bf16.msra.mxu0 0
    %1474 = vmatprep.subr.bf16.mxu0 0
    %1475 = vmatpush1.bf16.msra.mxu0 0
    %1476 = vmatprep.subr.bf16.mxu0 0
    %1477 = vmatpush1.bf16.msra.mxu0 0
    %1478 = vmatprep.subr.bf16.mxu0 0
    %1479 = vmatpush1.bf16.msra.mxu0 0
    %1480 = vmatprep.subr.bf16.mxu0 0
    %1481 = vmatpush1.bf16.msra.mxu0 0
    %1482 = vmatprep.subr.bf16.mxu0 0
    %1483 = vmatpush1.bf16.msra.mxu0 0
    %1484 = vmatprep.subr.bf16.mxu0 0
    %1485 = vmatpush1.bf16.msra.mxu0 0
    %1486 = vmatprep.subr.bf16.mxu0 0
    %1487 = vmatpush1.bf16.msra.mxu0 0
    %1488 = vmatprep.mubr.bf16.mxu0 0
    %1489 = vmatmul.mubr.bf16.gmra.mrb[0].mxu0 %v1454
    %v1490 = vpop.f32.mrb[0].mxu0
    %v1491 = vadd.f32 0.0, %v1490
    %v1492 = vpop.f32.mrb[0].mxu0
    %v1493 = vpop.f32.mrb[0].mxu0
    %v1494 = vadd.f32 0.0, %v1493
    %v1495 = vpop.f32.mrb[0].mxu0
    %1496 = vdwg.mxu0
    %1499 = vrot.lane.b32.xlu0 %v18, 112
    %v1500 = vpop.permute.xlu0 %1499
    %1501 = vrot.lane.b32.xlu0 %v19, 112
    %v1502 = vpop.permute.xlu0 %1501
    %v1506 = vsel %vm1375, %v1491, 0
    %v1509 = vsel %vm1375, %v1494, 0
    %1511 = vmatprep.subr.mxu0 0.0
    %1512 = vmatpush1.msra.mxu0 %v1500
    %1513 = vmatprep.subr.mxu0 0.0
    %1514 = vmatpush1.msra.mxu0 %v1502
    %1515 = vmatprep.subr.mxu0 0.0
    %1516 = vmatpush1.msra.mxu0 0.0
    %1517 = vmatprep.subr.mxu0 0.0
    %1518 = vmatpush1.msra.mxu0 0.0
    %1519 = vmatprep.subr.mxu0 0.0
    %1520 = vmatpush1.msra.mxu0 0.0
    %1521 = vmatprep.subr.mxu0 0.0
    %1522 = vmatpush1.msra.mxu0 0.0
    %1523 = vmatprep.subr.mxu0 0.0
    %1524 = vmatpush1.msra.mxu0 0.0
    %1525 = vmatprep.subr.mxu0 0.0
    %1526 = vmatpush1.msra.mxu0 0.0
    %1527 = vmatprep.subr.mxu0 0.0
    %1528 = vmatpush1.msra.mxu0 0.0
    %1529 = vmatprep.subr.mxu0 0.0
    %1530 = vmatpush1.msra.mxu0 0.0
    %1531 = vmatprep.subr.mxu0 0.0
    %1532 = vmatpush1.msra.mxu0 0.0
    %1533 = vmatprep.subr.mxu0 0.0
    %1534 = vmatpush1.msra.mxu0 0.0
    %1535 = vmatprep.subr.mxu0 0.0
    %1536 = vmatpush1.msra.mxu0 0.0
    %1537 = vmatprep.subr.mxu0 0.0
    %1538 = vmatpush1.msra.mxu0 0.0
    %1539 = vmatprep.subr.mxu0 0.0
    %1540 = vmatpush1.msra.mxu0 0.0
    %1541 = vmatprep.subr.mxu0 0.0
    %1542 = vmatpush1.msra.mxu0 0.0
    %1543 = vmatprep.subr.mxu0 0.0
    %1544 = vmatpush1.msra.mxu0 0.0
    %1545 = vmatprep.subr.mxu0 0.0
    %1546 = vmatpush1.msra.mxu0 0.0
    %1547 = vmatprep.subr.mxu0 0.0
    %1548 = vmatpush1.msra.mxu0 0.0
    %1549 = vmatprep.subr.mxu0 0.0
    %1550 = vmatpush1.msra.mxu0 0.0
    %1551 = vmatprep.subr.mxu0 0.0
    %1552 = vmatpush1.msra.mxu0 0.0
    %1553 = vmatprep.subr.mxu0 0.0
    %1554 = vmatpush1.msra.mxu0 0.0
    %1555 = vmatprep.subr.mxu0 0.0
    %1556 = vmatpush1.msra.mxu0 0.0
    %1557 = vmatprep.subr.mxu0 0.0
    %1558 = vmatpush1.msra.mxu0 0.0
    %1559 = vmatprep.subr.mxu0 0.0
    %1560 = vmatpush1.msra.mxu0 0.0
    %1561 = vmatprep.subr.mxu0 0.0
    %1562 = vmatpush1.msra.mxu0 0.0
    %1563 = vmatprep.subr.mxu0 0.0
    %1564 = vmatpush1.msra.mxu0 0.0
    %1565 = vmatprep.subr.mxu0 0.0
    %1566 = vmatpush1.msra.mxu0 0.0
    %1567 = vmatprep.subr.mxu0 0.0
    %1568 = vmatpush1.msra.mxu0 0.0
    %1569 = vmatprep.subr.mxu0 0.0
    %1570 = vmatpush1.msra.mxu0 0.0
    %1571 = vmatprep.subr.mxu0 0.0
    %1572 = vmatpush1.msra.mxu0 0.0
    %1573 = vmatprep.subr.mxu0 0.0
    %1574 = vmatpush1.msra.mxu0 0.0
    %1575 = vmatprep.mubr.f32.mxu0 0.0
    %1576 = vmatmul.mubr.f32.gmra.mrb[0].mxu0 %v1506
    %v1577 = vpop.f32.mrb[0].mxu0
    %v1578 = vadd.f32 0.0, %v1577
    %v1579 = vpop.f32.mrb[0].mxu0
    %1580 = vmatprep.mubr.f32.mxu0 0.0
    %1581 = vmatmul.mubr.f32.gmra.mrb[0].mxu0 %v1509
    %v1582 = vpop.f32.mrb[0].mxu0
    %v1583 = vadd.f32 0.0, %v1582
    %v1584 = vpop.f32.mrb[0].mxu0
    %1585 = vdwg.mxu0
    %1587 = vset.pattern.permute.xlu0 0
    %1588 = vperm.xlu0 %1587, %v1578
    %v1589 = vpop.permute.xlu0 %1588
    %1592 = vset.pattern.permute.xlu0 0
    %1593 = vperm.xlu0 %1592, %v1583
    %v1594 = vpop.permute.xlu0 %1593
    %v1596 = vmul.f32 %v18, %v1589
    %v1597 = vmul.f32 %v19, %v1594
    %v1598 = vlaneseq
    %v1599 = vshrl.u32 %v1598, 7
    %v1600 = vsub.s32 0, %v1599
    %v1601 = vrot.slane %v16, %v1600
    %1604 = vrot.lane.b32.xlu0 %v1596, 96
    %v1605 = vpop.permute.xlu0 %1604
    %1606 = vrot.lane.b32.xlu0 %v1597, 96
    %v1607 = vpop.permute.xlu0 %1606
    %v1611 = vsel %vm1375, %v17, 0
    %1613 = vmatprep.subr.mxu0 0.0
    %1614 = vmatpush1.msra.mxu0 %v1605
    %1615 = vmatprep.subr.mxu0 0.0
    %1616 = vmatpush1.msra.mxu0 %v1607
    %1617 = vmatprep.subr.mxu0 0.0
    %1618 = vmatpush1.msra.mxu0 0.0
    %1619 = vmatprep.subr.mxu0 0.0
    %1620 = vmatpush1.msra.mxu0 0.0
    %1621 = vmatprep.subr.mxu0 0.0
    %1622 = vmatpush1.msra.mxu0 0.0
    %1623 = vmatprep.subr.mxu0 0.0
    %1624 = vmatpush1.msra.mxu0 0.0
    %1625 = vmatprep.subr.mxu0 0.0
    %1626 = vmatpush1.msra.mxu0 0.0
    %1627 = vmatprep.subr.mxu0 0.0
    %1628 = vmatpush1.msra.mxu0 0.0
    %1629 = vmatprep.subr.mxu0 0.0
    %1630 = vmatpush1.msra.mxu0 0.0
    %1631 = vmatprep.subr.mxu0 0.0
    %1632 = vmatpush1.msra.mxu0 0.0
    %1633 = vmatprep.subr.mxu0 0.0
    %1634 = vmatpush1.msra.mxu0 0.0
    %1635 = vmatprep.subr.mxu0 0.0
    %1636 = vmatpush1.msra.mxu0 0.0
    %1637 = vmatprep.subr.mxu0 0.0
    %1638 = vmatpush1.msra.mxu0 0.0
    %1639 = vmatprep.subr.mxu0 0.0
    %1640 = vmatpush1.msra.mxu0 0.0
    %1641 = vmatprep.subr.mxu0 0.0
    %1642 = vmatpush1.msra.mxu0 0.0
    %1643 = vmatprep.subr.mxu0 0.0
    %1644 = vmatpush1.msra.mxu0 0.0
    %1645 = vmatprep.subr.mxu0 0.0
    %1646 = vmatpush1.msra.mxu0 0.0
    %1647 = vmatprep.subr.mxu0 0.0
    %1648 = vmatpush1.msra.mxu0 0.0
    %1649 = vmatprep.subr.mxu0 0.0
    %1650 = vmatpush1.msra.mxu0 0.0
    %1651 = vmatprep.subr.mxu0 0.0
    %1652 = vmatpush1.msra.mxu0 0.0
    %1653 = vmatprep.subr.mxu0 0.0
    %1654 = vmatpush1.msra.mxu0 0.0
    %1655 = vmatprep.subr.mxu0 0.0
    %1656 = vmatpush1.msra.mxu0 0.0
    %1657 = vmatprep.subr.mxu0 0.0
    %1658 = vmatpush1.msra.mxu0 0.0
    %1659 = vmatprep.subr.mxu0 0.0
    %1660 = vmatpush1.msra.mxu0 0.0
    %1661 = vmatprep.subr.mxu0 0.0
    %1662 = vmatpush1.msra.mxu0 0.0
    %1663 = vmatprep.subr.mxu0 0.0
    %1664 = vmatpush1.msra.mxu0 0.0
    %1665 = vmatprep.subr.mxu0 0.0
    %1666 = vmatpush1.msra.mxu0 0.0
    %1667 = vmatprep.subr.mxu0 0.0
    %1668 = vmatpush1.msra.mxu0 0.0
    %1669 = vmatprep.subr.mxu0 0.0
    %1670 = vmatpush1.msra.mxu0 0.0
    %1671 = vmatprep.subr.mxu0 0.0
    %1672 = vmatpush1.msra.mxu0 0.0
    %1673 = vmatprep.subr.mxu0 0.0
    %1674 = vmatpush1.msra.mxu0 0.0
    %1675 = vmatprep.subr.mxu0 0.0
    %1676 = vmatpush1.msra.mxu0 0.0
    %1677 = vmatprep.mubr.f32.mxu0 0.0
    %1678 = vmatmul.mubr.f32.gmra.mrb[0].mxu0 %v1611
    %v1679 = vpop.f32.mrb[0].mxu0
    %v1680 = vadd.f32 %v1601, %v1679
    %v1681 = vpop.f32.mrb[0].mxu0
    %1682 = vdwg.mxu0
    %vm1683 = vcmask 25600
    %1684 = vst.msk [vmem:[#allocation2] sm:$0x3] %vm1683, %v1680
    // Predicated region
    $region10: #{bnet_forward.1} parent=1 // pred_check
      _
    $region11: #{bnet_forward.1} parent=1 // pred_check_branch
      %1686 = sbr.rel (0) target = $region13
    $region12: #{bnet_forward.1} parent=1 // pred_region
      %s1688 = ssub.s32 32, 32
      %1689 = vsyncadd [#allocation3], %s1688
      %s1691 = sshll.u32 [#allocation2], 4
      %s1692 = int_to_ptr.vmem [resolvable:$true] %s1691
      %1694 = dma.vmem_to_hbm [thread:$0]  %s1692, 32, %s2, [#allocation3]
    $region13: #{bnet_forward.1} parent=1 // pred_fallthru
      _
    // Predicated region
    $region14: #{bnet_forward.1} parent=1 // pred_check
      _
    $region15: #{bnet_forward.1} parent=1 // pred_check_branch
      %1696 = sbr.rel (0) target = $region17
    $region16: #{bnet_forward.1} parent=1 // pred_region
      %1697 = dma.done [#allocation3], 32
    $region17: #{bnet_forward.1} parent=1 // pred_fallthru
      _
    %1698 = vsyncpa [#allocation3], 1

</llo_original>
